<compile_context>
chip_gen: v7x
topology: tpu7x:2x2x1
jax: 0.10.0
libtpu: 0.0.40
codegen_flags: <defaults>
</compile_context>

<pallas_src>
import jax
import jax.numpy as jnp
from jax.experimental import pallas as pl
from jax.experimental.pallas import tpu as pltpu


# ------------------------------ helpers -------------------------------------
def _round_up(n, m):
    return (n + m - 1) // m * m


def _largest_divisor_leq(n, cap):
    d = max(1, min(n, cap))
    while n % d:
        d -= 1
    return d


def _pack_gate_matrix(w, in_pad, h_pad):
    """PyTorch gate weight (4H, Din), gate order i,f,g,o ->
    transposed, per-gate zero-padded matrix of shape (in_pad, 4*h_pad)."""
    four_h, din = w.shape
    h = four_h // 4
    out = jnp.zeros((in_pad, 4 * h_pad), w.dtype)
    for k in range(4):
        out = out.at[:din, k * h_pad:k * h_pad + h].set(w[k * h:(k + 1) * h, :].T)
    return out


def _pack_gate_bias(b, h_pad):
    """(4H,) combined bias -> (1, 4*h_pad), per-gate zero-padded (pads stay 0
    so padded hidden lanes remain exactly zero through the recurrence)."""
    four_h = b.shape[0]
    h = four_h // 4
    out = jnp.zeros((1, 4 * h_pad), b.dtype)
    for k in range(4):
        out = out.at[0, k * h_pad:k * h_pad + h].set(b[k * h:(k + 1) * h])
    return out


# ------------------------ row-tiled matmul + bias ----------------------------
def _matmul_bias_kernel(x_ref, w_ref, b_ref, o_ref):
    acc = jnp.dot(x_ref[...], w_ref[...], preferred_element_type=jnp.float32)
    o_ref[...] = (acc + b_ref[...].astype(jnp.float32)).astype(o_ref.dtype)


def matmul_bias_pallas(x2d, w_t, b_row, out_dtype, *, rows_per_step=8,
                       row_tile=512):
    """x2d: (N, K); w_t: (K, M); b_row: (1, M).
    N is a multiple of rows_per_step (itself a multiple of 8); K, M of 128.
    row_tile=512 per v5e/v6e roofline data; keep 256 and add M/K tiling on
    v7x for very large M (see TODO above)."""
    N, K = x2d.shape
    M = w_t.shape[1]
    # Tile is always a multiple of rows_per_step -> multiple of 8 sublanes,
    # and always divides N exactly (no masked stores, no awkward remainders).
    tn = rows_per_step * _largest_divisor_leq(
        N // rows_per_step, max(1, row_tile // rows_per_step))
    return pl.pallas_call(
        _matmul_bias_kernel,
        out_shape=jax.ShapeDtypeStruct((N, M), out_dtype),
        grid_spec=pltpu.PrefetchScalarGridSpec(
            num_scalar_prefetch=0,
            grid=(N // tn,),
            in_specs=[
                pl.BlockSpec((tn, K), lambda i: (i, 0)),
                pl.BlockSpec((K, M), lambda i: (0, 0)),
                pl.BlockSpec((1, M), lambda i: (0, 0)),
            ],
            out_specs=pl.BlockSpec((tn, M), lambda i: (i, 0)),
        ),
        compiler_params=pltpu.CompilerParams(
            dimension_semantics=("parallel",),
            vmem_limit_bytes=64 * 1024 * 1024),
    )(x2d, w_t, b_row)


# --------------------- fused (x-proj + recurrence) LSTM ----------------------
def _make_fused_lstm_kernel(tt, bp, hp):
    def kernel(x_ref, wih_ref, whh_ref, b_ref, y_ref, h_scr, c_scr, gx_scr):
        @pl.when(pl.program_id(0) == 0)
        def _():
            h_scr[...] = jnp.zeros_like(h_scr)   # h0 = zeros (as in the module)
            c_scr[...] = jnp.zeros_like(c_scr)   # c0 = zeros

        # One big lane-dense input-projection matmul per time block; the
        # gates_x intermediate lives only in VMEM (no HBM round trip).
        gx_scr[...] = (
            jnp.dot(x_ref[...], wih_ref[...],
                    preferred_element_type=jnp.float32)
            + b_ref[...].astype(jnp.float32))

        whh = whh_ref[...]                        # hoist loop-invariant load

        def step(i, carry):
            h, c = carry                          # state carried in vregs
            row = pl.multiple_of(i * bp, bp)
            gates = gx_scr[pl.ds(row, bp), :] + jnp.dot(
                h.astype(whh.dtype), whh, preferred_element_type=jnp.float32)
            i_g = jax.nn.sigmoid(gates[:, 0 * hp:1 * hp])
            f_g = jax.nn.sigmoid(gates[:, 1 * hp:2 * hp])
            g_g = jnp.tanh(gates[:, 2 * hp:3 * hp])
            o_g = jax.nn.sigmoid(gates[:, 3 * hp:4 * hp])
            c_new = f_g * c + i_g * g_g
            h_new = o_g * jnp.tanh(c_new)
            y_ref[pl.ds(row, bp), :] = h_new.astype(y_ref.dtype)
            return (h_new, c_new)

        h, c = jax.lax.fori_loop(0, tt, step, (h_scr[...], c_scr[...]),
                                 unroll=True)
        h_scr[...] = h                            # single writeback per block
        c_scr[...] = c

    return kernel


def lstm_fused_pallas(x2d, wih_p, whh_p, b_row, t_pad, b_pad, hp, out_dtype,
                      time_block=32):
    """x2d: (Tp*Bp, Dp) time-major flattened input; wih_p: (Dp, 4*hp);
    whh_p: (hp, 4*hp); b_row: (1, 4*hp) f32.  Returns (Tp*Bp, hp)."""
    n_rows, dp = x2d.shape
    assert n_rows == t_pad * b_pad
    g = 4 * hp
    # t_pad is a multiple of 8, so tt >= 8 and divides t_pad exactly.
    tt = _largest_divisor_leq(t_pad, time_block)
    kernel = _make_fused_lstm_kernel(tt, b_pad, hp)
    return pl.pallas_call(
        kernel,
        out_shape=jax.ShapeDtypeStruct((n_rows, hp), out_dtype),
        grid_spec=pltpu.PrefetchScalarGridSpec(
            num_scalar_prefetch=0,
            grid=(t_pad // tt,),
            in_specs=[
                pl.BlockSpec((tt * b_pad, dp), lambda t: (t, 0)),
                pl.BlockSpec((dp, g), lambda t: (0, 0)),
                pl.BlockSpec((hp, g), lambda t: (0, 0)),
                pl.BlockSpec((1, g), lambda t: (0, 0)),
            ],
            out_specs=pl.BlockSpec((tt * b_pad, hp), lambda t: (t, 0)),
            scratch_shapes=[
                pltpu.VMEM((b_pad, hp), jnp.float32),        # h state (carried)
                pltpu.VMEM((b_pad, hp), jnp.float32),        # c state (carried)
                pltpu.VMEM((tt * b_pad, g), jnp.float32),    # gates_x (VMEM only)
            ],
        ),
        compiler_params=pltpu.CompilerParams(
            dimension_semantics=("arbitrary",),   # time is sequential
            vmem_limit_bytes=64 * 1024 * 1024),
    )(x2d, wih_p, whh_p, b_row)


# ------------------------------ full forward ---------------------------------
def rnn_forward(x, params, matmul_dtype=jnp.float32):
    """x: (B, T, input_size), batch_first like the PyTorch module.
    matmul_dtype=jnp.bfloat16 enables bf16 MXU operands / bf16 inter-layer
    activations (f32 accumulate + f32 gate math) for v6e/v7x."""
    B, T, Din = x.shape
    wih_e, whh_e, bih_e, bhh_e = params["encoder"]
    wih_d, whh_d, bih_d, bhh_d = params["decoder"]
    w_lin, b_lin = params["linear"]
    H = whh_e.shape[1]                           # encoder hidden size

    # Padded hardware-friendly dims.
    Bp = _round_up(B, 8)                         # sublanes
    Dp = _round_up(Din, 128)                     # lanes (input / decoder hidden)
    Hp = _round_up(H, 128)                       # lanes (encoder hidden)
    Tp = _round_up(T, 8)                         # time blocks never degenerate

    # Time-major, zero-padded input (dropout p1 is identity in eval).
    x_tm = jnp.transpose(x, (1, 0, 2))                               # (T,B,Din)
    x_tm = jnp.pad(x_tm, ((0, Tp - T), (0, Bp - B), (0, Dp - Din)))  # (Tp,Bp,Dp)
    x2d = x_tm.reshape(Tp * Bp, Dp).astype(matmul_dtype)

    # Packed weights (gate order i,f,g,o preserved; pads are zeros so padded
    # hidden lanes stay exactly zero through the recurrence).
    wih_e_p = _pack_gate_matrix(wih_e, Dp, Hp).astype(matmul_dtype)  # (Dp,4Hp)
    whh_e_p = _pack_gate_matrix(whh_e, Hp, Hp).astype(matmul_dtype)  # (Hp,4Hp)
    b_e_p = _pack_gate_bias(bih_e + bhh_e, Hp)                       # f32

    wih_d_p = _pack_gate_matrix(wih_d, Hp, Dp).astype(matmul_dtype)  # (Hp,4Dp)
    whh_d_p = _pack_gate_matrix(whh_d, Dp, Dp).astype(matmul_dtype)  # (Dp,4Dp)
    b_d_p = _pack_gate_bias(bih_d + bhh_d, Dp)                       # f32

    w_lin_p = (jnp.zeros((Dp, Dp), jnp.float32)
               .at[:Din, :Din].set(w_lin.T).astype(matmul_dtype))
    b_lin_p = jnp.zeros((1, Dp), jnp.float32).at[0, :Din].set(b_lin)

    # ----- encoder LSTM (fused x-projection + recurrence) -----
    h_enc = lstm_fused_pallas(x2d, wih_e_p, whh_e_p, b_e_p,
                              Tp, Bp, Hp, matmul_dtype)              # (Tp*Bp,Hp)

    # ----- decoder LSTM -----
    h_dec = lstm_fused_pallas(h_enc, wih_d_p, whh_d_p, b_d_p,
                              Tp, Bp, Dp, matmul_dtype)              # (Tp*Bp,Dp)

    # ----- linear (dropout p2 is identity in eval) -----
    y2d = matmul_bias_pallas(h_dec, w_lin_p, b_lin_p, jnp.float32,
                             rows_per_step=Bp)                       # (Tp*Bp,Dp)
    y = y2d.reshape(Tp, Bp, Dp)[:T, :B, :Din]
    return jnp.transpose(y, (1, 0, 2))                               # (B,T,Din)


# ----------------------------- pure-JAX reference ---------------------------
def lstm_ref(x_tm, w_ih, w_hh, b_ih, b_hh):
    T, B, D = x_tm.shape
    H = w_hh.shape[1]

    def step(carry, x_t):
        h, c = carry
        gates = x_t @ w_ih.T + b_ih + h @ w_hh.T + b_hh
        i, f, g, o = jnp.split(gates, 4, axis=-1)
        i, f, o = jax.nn.sigmoid(i), jax.nn.sigmoid(f), jax.nn.sigmoid(o)
        g = jnp.tanh(g)
        c = f * c + i * g
        h = o * jnp.tanh(c)
        return (h, c), h

    init = (jnp.zeros((B, H), x_tm.dtype), jnp.zeros((B, H), x_tm.dtype))
    _, ys = jax.lax.scan(step, init, x_tm)
    return ys


def rnn_forward_ref(x, params):
    x_tm = jnp.transpose(x, (1, 0, 2))
    h_enc = lstm_ref(x_tm, *params["encoder"])
    h_dec = lstm_ref(h_enc, *params["decoder"])
    w, b = params["linear"]
    y = h_dec @ w.T + b
    return jnp.transpose(y, (1, 0, 2))


# ----------------------------- parameter init -------------------------------
def init_params(key, input_size, hidden_size):
    ks = jax.random.split(key, 10)

    def u(k, shape, scale):
        return jax.random.uniform(k, shape, jnp.float32, -scale, scale)

    se = 1.0 / jnp.sqrt(hidden_size)
    sd = 1.0 / jnp.sqrt(input_size)
    return {
        "encoder": (
            u(ks[0], (4 * hidden_size, input_size), se),
            u(ks[1], (4 * hidden_size, hidden_size), se),
            u(ks[2], (4 * hidden_size,), se),
            u(ks[3], (4 * hidden_size,), se),
        ),
        "decoder": (
            u(ks[4], (4 * input_size, hidden_size), sd),
            u(ks[5], (4 * input_size, input_size), sd),
            u(ks[6], (4 * input_size,), sd),
            u(ks[7], (4 * input_size,), sd),
        ),
        "linear": (
            u(ks[8], (input_size, input_size), sd),
            u(ks[9], (input_size,), sd),
        ),
    }


if __name__ == "__main__":
    batch, seq, input_size, hidden_size = 2, 8, 16, 32

    key = jax.random.PRNGKey(0)
    kx, kp = jax.random.split(key)
    x = jax.random.normal(kx, (batch, seq, input_size), jnp.float32)
    params = init_params(kp, input_size, hidden_size)

    ref = rnn_forward_ref(x, params)

    # f32 MXU operands: bit-tight check vs. the f32 reference.
    out = jax.block_until_ready(rnn_forward(x, params))
    assert out.shape == (batch, seq, input_size)
    assert jnp.allclose(out, ref, atol=1e-4, rtol=1e-4)

    # bf16 MXU operands (v6e/v7x optimization path): relaxed tolerance.
    out_bf16 = jax.block_until_ready(
        rnn_forward(x, params, matmul_dtype=jnp.bfloat16))
    assert out_bf16.shape == (batch, seq, input_size)
    assert jnp.allclose(out_bf16, ref, atol=5e-2, rtol=5e-2)

    print("KERNEL_OK")
</pallas_src>

<mosaic_0001>
module attributes {stable_mosaic.version = 11 : i64} {
  func.func @kernel(%arg0: i32, %arg1: memref<64x128xf32, #tpu.memory_space<vmem>>, %arg2: memref<128x512xf32, #tpu.memory_space<vmem>>, %arg3: memref<128x512xf32, #tpu.memory_space<vmem>>, %arg4: memref<1x512xf32, #tpu.memory_space<vmem>>, %arg5: memref<64x128xf32, #tpu.memory_space<vmem>>, %arg6: memref<8x128xf32, #tpu.memory_space<vmem>>, %arg7: memref<8x128xf32, #tpu.memory_space<vmem>>, %arg8: memref<64x512xf32, #tpu.memory_space<vmem>>) attributes {dimension_semantics = [#tpu.dimension_semantics<arbitrary>], iteration_bounds = array<i64: 1>, scalar_prefetch = 0 : i64, scratch_operands = 3 : i64, tpu.core_type = #tpu.core_type<tc>, window_params = [{transform_indices = @transform_0, window_bounds = array<i64: 64, 128>}, {pipeline_mode = #tpu.pipeline_mode<synchronous>, transform_indices = @transform_1, window_bounds = array<i64: 128, 512>}, {pipeline_mode = #tpu.pipeline_mode<synchronous>, transform_indices = @transform_2, window_bounds = array<i64: 128, 512>}, {pipeline_mode = #tpu.pipeline_mode<synchronous>, transform_indices = @transform_3, window_bounds = array<i64: 1, 512>}, {transform_indices = @transform_4, window_bounds = array<i64: 64, 128>}]} {
    %c0_i32 = arith.constant 0 : i32
    %0 = arith.cmpi eq, %arg0, %c0_i32 : i32
    %1 = arith.extui %0 : i1 to i32
    %c0_i32_0 = arith.constant 0 : i32
    %2 = arith.cmpi ne, %1, %c0_i32_0 : i32
    scf.if %2 {
      %cst_75 = arith.constant 0.000000e+00 : f32
      %279 = vector.broadcast %cst_75 : f32 to vector<8x128xf32>
      %c0_76 = arith.constant 0 : index
      %c0_77 = arith.constant 0 : index
      %280 = vector.load %arg6[%c0_76, %c0_77] : memref<8x128xf32, #tpu.memory_space<vmem>>, vector<8x128xf32>
      tpu.vector_store %arg6[%c0_76, %c0_77], %279 {strides = array<i32>} : memref<8x128xf32, #tpu.memory_space<vmem>>, vector<8x128xf32>,
      %cst_78 = arith.constant 0.000000e+00 : f32
      %281 = vector.broadcast %cst_78 : f32 to vector<8x128xf32>
      %c0_79 = arith.constant 0 : index
      %c0_80 = arith.constant 0 : index
      %282 = vector.load %arg7[%c0_79, %c0_80] : memref<8x128xf32, #tpu.memory_space<vmem>>, vector<8x128xf32>
      tpu.vector_store %arg7[%c0_79, %c0_80], %281 {strides = array<i32>} : memref<8x128xf32, #tpu.memory_space<vmem>>, vector<8x128xf32>,
    } else {
    }
    %c0 = arith.constant 0 : index
    %c0_1 = arith.constant 0 : index
    %3 = vector.load %arg1[%c0, %c0_1] : memref<64x128xf32, #tpu.memory_space<vmem>>, vector<64x128xf32>
    %c0_2 = arith.constant 0 : index
    %c0_3 = arith.constant 0 : index
    %4 = vector.load %arg2[%c0_2, %c0_3] : memref<128x512xf32, #tpu.memory_space<vmem>>, vector<128x512xf32>
    %cst = arith.constant dense<0.000000e+00> : vector<64x512xf32>
    %5 = tpu.matmul %3, %4, %cst {dimension_numbers = #tpu.dot_dimension_numbers<[1], [0], [0], [1], [0, 0, 1, 1], [], []>} : vector<64x128xf32>, vector<128x512xf32>, vector<64x512xf32> -> vector<64x512xf32>
    %c0_4 = arith.constant 0 : index
    %c0_5 = arith.constant 0 : index
    %6 = vector.load %arg4[%c0_4, %c0_5] : memref<1x512xf32, #tpu.memory_space<vmem>>, vector<1x512xf32>
    %7 = vector.broadcast %6 : vector<1x512xf32> to vector<64x512xf32>
    %8 = arith.addf %5, %7 : vector<64x512xf32>
    %c0_6 = arith.constant 0 : index
    %c0_7 = arith.constant 0 : index
    %9 = vector.load %arg8[%c0_6, %c0_7] : memref<64x512xf32, #tpu.memory_space<vmem>>, vector<64x512xf32>
    tpu.vector_store %arg8[%c0_6, %c0_7], %8 {strides = array<i32>} : memref<64x512xf32, #tpu.memory_space<vmem>>, vector<64x512xf32>,
    %c0_8 = arith.constant 0 : index
    %c0_9 = arith.constant 0 : index
    %10 = vector.load %arg3[%c0_8, %c0_9] : memref<128x512xf32, #tpu.memory_space<vmem>>, vector<128x512xf32>
    %c0_10 = arith.constant 0 : index
    %c0_11 = arith.constant 0 : index
    %11 = vector.load %arg6[%c0_10, %c0_11] : memref<8x128xf32, #tpu.memory_space<vmem>>, vector<8x128xf32>
    %c0_12 = arith.constant 0 : index
    %c0_13 = arith.constant 0 : index
    %12 = vector.load %arg7[%c0_12, %c0_13] : memref<8x128xf32, #tpu.memory_space<vmem>>, vector<8x128xf32>
    %c0_i32_14 = arith.constant 0 : i32
    %c8_i32 = arith.constant 8 : i32
    %13 = arith.muli %c0_i32_14, %c8_i32 : i32
    %14 = tpu.assume_multiple %13, 8 : i32
    %15 = arith.index_cast %14 : i32 to index
    %c0_15 = arith.constant 0 : index
    %16 = vector.load %arg8[%15, %c0_15] : memref<64x512xf32, #tpu.memory_space<vmem>>, vector<8x512xf32>
    %cst_16 = arith.constant dense<0.000000e+00> : vector<8x512xf32>
    %17 = tpu.matmul %11, %10, %cst_16 {dimension_numbers = #tpu.dot_dimension_numbers<[1], [0], [0], [1], [0, 0, 1, 1], [], []>} : vector<8x128xf32>, vector<128x512xf32>, vector<8x512xf32> -> vector<8x512xf32>
    %18 = arith.addf %16, %17 : vector<8x512xf32>
    %19 = vector.extract_strided_slice %18 {offsets = [0, 0], sizes = [8, 128], strides = [1, 1]} : vector<8x512xf32> to vector<8x128xf32>
    %20 = arith.negf %19 : vector<8x128xf32>
    %21 = math.exp %20 : vector<8x128xf32>
    %cst_17 = arith.constant 1.000000e+00 : f32
    %22 = vector.broadcast %cst_17 : f32 to vector<8x128xf32>
    %23 = arith.addf %22, %21 : vector<8x128xf32>
    %24 = arith.divf %22, %23 : vector<8x128xf32>
    %25 = vector.extract_strided_slice %18 {offsets = [0, 128], sizes = [8, 128], strides = [1, 1]} : vector<8x512xf32> to vector<8x128xf32>
    %26 = arith.negf %25 : vector<8x128xf32>
    %27 = math.exp %26 : vector<8x128xf32>
    %cst_18 = arith.constant 1.000000e+00 : f32
    %28 = vector.broadcast %cst_18 : f32 to vector<8x128xf32>
    %29 = arith.addf %28, %27 : vector<8x128xf32>
    %30 = arith.divf %28, %29 : vector<8x128xf32>
    %31 = vector.extract_strided_slice %18 {offsets = [0, 256], sizes = [8, 128], strides = [1, 1]} : vector<8x512xf32> to vector<8x128xf32>
    %32 = math.tanh %31 : vector<8x128xf32>
    %33 = vector.extract_strided_slice %18 {offsets = [0, 384], sizes = [8, 128], strides = [1, 1]} : vector<8x512xf32> to vector<8x128xf32>
    %34 = arith.negf %33 : vector<8x128xf32>
    %35 = math.exp %34 : vector<8x128xf32>
    %cst_19 = arith.constant 1.000000e+00 : f32
    %36 = vector.broadcast %cst_19 : f32 to vector<8x128xf32>
    %37 = arith.addf %36, %35 : vector<8x128xf32>
    %38 = arith.divf %36, %37 : vector<8x128xf32>
    %39 = arith.mulf %30, %12 : vector<8x128xf32>
    %40 = arith.mulf %24, %32 : vector<8x128xf32>
    %41 = arith.addf %39, %40 : vector<8x128xf32>
    %42 = math.tanh %41 : vector<8x128xf32>
    %43 = arith.mulf %38, %42 : vector<8x128xf32>
    %44 = arith.index_cast %14 : i32 to index
    %c0_20 = arith.constant 0 : index
    %45 = vector.load %arg5[%44, %c0_20] : memref<64x128xf32, #tpu.memory_space<vmem>>, vector<8x128xf32>
    tpu.vector_store %arg5[%44, %c0_20], %43 {strides = array<i32>} : memref<64x128xf32, #tpu.memory_space<vmem>>, vector<8x128xf32>,
    %c1_i32 = arith.constant 1 : i32
    %c8_i32_21 = arith.constant 8 : i32
    %46 = arith.muli %c1_i32, %c8_i32_21 : i32
    %47 = tpu.assume_multiple %46, 8 : i32
    %48 = arith.index_cast %47 : i32 to index
    %c0_22 = arith.constant 0 : index
    %49 = vector.load %arg8[%48, %c0_22] : memref<64x512xf32, #tpu.memory_space<vmem>>, vector<8x512xf32>
    %cst_23 = arith.constant dense<0.000000e+00> : vector<8x512xf32>
    %50 = tpu.matmul %43, %10, %cst_23 {dimension_numbers = #tpu.dot_dimension_numbers<[1], [0], [0], [1], [0, 0, 1, 1], [], []>} : vector<8x128xf32>, vector<128x512xf32>, vector<8x512xf32> -> vector<8x512xf32>
    %51 = arith.addf %49, %50 : vector<8x512xf32>
    %52 = vector.extract_strided_slice %51 {offsets = [0, 0], sizes = [8, 128], strides = [1, 1]} : vector<8x512xf32> to vector<8x128xf32>
    %53 = arith.negf %52 : vector<8x128xf32>
    %54 = math.exp %53 : vector<8x128xf32>
    %cst_24 = arith.constant 1.000000e+00 : f32
    %55 = vector.broadcast %cst_24 : f32 to vector<8x128xf32>
    %56 = arith.addf %55, %54 : vector<8x128xf32>
    %57 = arith.divf %55, %56 : vector<8x128xf32>
    %58 = vector.extract_strided_slice %51 {offsets = [0, 128], sizes = [8, 128], strides = [1, 1]} : vector<8x512xf32> to vector<8x128xf32>
    %59 = arith.negf %58 : vector<8x128xf32>
    %60 = math.exp %59 : vector<8x128xf32>
    %cst_25 = arith.constant 1.000000e+00 : f32
    %61 = vector.broadcast %cst_25 : f32 to vector<8x128xf32>
    %62 = arith.addf %61, %60 : vector<8x128xf32>
    %63 = arith.divf %61, %62 : vector<8x128xf32>
    %64 = vector.extract_strided_slice %51 {offsets = [0, 256], sizes = [8, 128], strides = [1, 1]} : vector<8x512xf32> to vector<8x128xf32>
    %65 = math.tanh %64 : vector<8x128xf32>
    %66 = vector.extract_strided_slice %51 {offsets = [0, 384], sizes = [8, 128], strides = [1, 1]} : vector<8x512xf32> to vector<8x128xf32>
    %67 = arith.negf %66 : vector<8x128xf32>
    %68 = math.exp %67 : vector<8x128xf32>
    %cst_26 = arith.constant 1.000000e+00 : f32
    %69 = vector.broadcast %cst_26 : f32 to vector<8x128xf32>
    %70 = arith.addf %69, %68 : vector<8x128xf32>
    %71 = arith.divf %69, %70 : vector<8x128xf32>
    %72 = arith.mulf %63, %41 : vector<8x128xf32>
    %73 = arith.mulf %57, %65 : vector<8x128xf32>
    %74 = arith.addf %72, %73 : vector<8x128xf32>
    %75 = math.tanh %74 : vector<8x128xf32>
    %76 = arith.mulf %71, %75 : vector<8x128xf32>
    %77 = arith.index_cast %47 : i32 to index
    %c0_27 = arith.constant 0 : index
    %78 = vector.load %arg5[%77, %c0_27] : memref<64x128xf32, #tpu.memory_space<vmem>>, vector<8x128xf32>
    tpu.vector_store %arg5[%77, %c0_27], %76 {strides = array<i32>} : memref<64x128xf32, #tpu.memory_space<vmem>>, vector<8x128xf32>,
    %c2_i32 = arith.constant 2 : i32
    %c8_i32_28 = arith.constant 8 : i32
    %79 = arith.muli %c2_i32, %c8_i32_28 : i32
    %80 = tpu.assume_multiple %79, 8 : i32
    %81 = arith.index_cast %80 : i32 to index
    %c0_29 = arith.constant 0 : index
    %82 = vector.load %arg8[%81, %c0_29] : memref<64x512xf32, #tpu.memory_space<vmem>>, vector<8x512xf32>
    %cst_30 = arith.constant dense<0.000000e+00> : vector<8x512xf32>
    %83 = tpu.matmul %76, %10, %cst_30 {dimension_numbers = #tpu.dot_dimension_numbers<[1], [0], [0], [1], [0, 0, 1, 1], [], []>} : vector<8x128xf32>, vector<128x512xf32>, vector<8x512xf32> -> vector<8x512xf32>
    %84 = arith.addf %82, %83 : vector<8x512xf32>
    %85 = vector.extract_strided_slice %84 {offsets = [0, 0], sizes = [8, 128], strides = [1, 1]} : vector<8x512xf32> to vector<8x128xf32>
    %86 = arith.negf %85 : vector<8x128xf32>
    %87 = math.exp %86 : vector<8x128xf32>
    %cst_31 = arith.constant 1.000000e+00 : f32
    %88 = vector.broadcast %cst_31 : f32 to vector<8x128xf32>
    %89 = arith.addf %88, %87 : vector<8x128xf32>
    %90 = arith.divf %88, %89 : vector<8x128xf32>
    %91 = vector.extract_strided_slice %84 {offsets = [0, 128], sizes = [8, 128], strides = [1, 1]} : vector<8x512xf32> to vector<8x128xf32>
    %92 = arith.negf %91 : vector<8x128xf32>
    %93 = math.exp %92 : vector<8x128xf32>
    %cst_32 = arith.constant 1.000000e+00 : f32
    %94 = vector.broadcast %cst_32 : f32 to vector<8x128xf32>
    %95 = arith.addf %94, %93 : vector<8x128xf32>
    %96 = arith.divf %94, %95 : vector<8x128xf32>
    %97 = vector.extract_strided_slice %84 {offsets = [0, 256], sizes = [8, 128], strides = [1, 1]} : vector<8x512xf32> to vector<8x128xf32>
    %98 = math.tanh %97 : vector<8x128xf32>
    %99 = vector.extract_strided_slice %84 {offsets = [0, 384], sizes = [8, 128], strides = [1, 1]} : vector<8x512xf32> to vector<8x128xf32>
    %100 = arith.negf %99 : vector<8x128xf32>
    %101 = math.exp %100 : vector<8x128xf32>
    %cst_33 = arith.constant 1.000000e+00 : f32
    %102 = vector.broadcast %cst_33 : f32 to vector<8x128xf32>
    %103 = arith.addf %102, %101 : vector<8x128xf32>
    %104 = arith.divf %102, %103 : vector<8x128xf32>
    %105 = arith.mulf %96, %74 : vector<8x128xf32>
    %106 = arith.mulf %90, %98 : vector<8x128xf32>
    %107 = arith.addf %105, %106 : vector<8x128xf32>
    %108 = math.tanh %107 : vector<8x128xf32>
    %109 = arith.mulf %104, %108 : vector<8x128xf32>
    %110 = arith.index_cast %80 : i32 to index
    %c0_34 = arith.constant 0 : index
    %111 = vector.load %arg5[%110, %c0_34] : memref<64x128xf32, #tpu.memory_space<vmem>>, vector<8x128xf32>
    tpu.vector_store %arg5[%110, %c0_34], %109 {strides = array<i32>} : memref<64x128xf32, #tpu.memory_space<vmem>>, vector<8x128xf32>,
    %c3_i32 = arith.constant 3 : i32
    %c8_i32_35 = arith.constant 8 : i32
    %112 = arith.muli %c3_i32, %c8_i32_35 : i32
    %113 = tpu.assume_multiple %112, 8 : i32
    %114 = arith.index_cast %113 : i32 to index
    %c0_36 = arith.constant 0 : index
    %115 = vector.load %arg8[%114, %c0_36] : memref<64x512xf32, #tpu.memory_space<vmem>>, vector<8x512xf32>
    %cst_37 = arith.constant dense<0.000000e+00> : vector<8x512xf32>
    %116 = tpu.matmul %109, %10, %cst_37 {dimension_numbers = #tpu.dot_dimension_numbers<[1], [0], [0], [1], [0, 0, 1, 1], [], []>} : vector<8x128xf32>, vector<128x512xf32>, vector<8x512xf32> -> vector<8x512xf32>
    %117 = arith.addf %115, %116 : vector<8x512xf32>
    %118 = vector.extract_strided_slice %117 {offsets = [0, 0], sizes = [8, 128], strides = [1, 1]} : vector<8x512xf32> to vector<8x128xf32>
    %119 = arith.negf %118 : vector<8x128xf32>
    %120 = math.exp %119 : vector<8x128xf32>
    %cst_38 = arith.constant 1.000000e+00 : f32
    %121 = vector.broadcast %cst_38 : f32 to vector<8x128xf32>
    %122 = arith.addf %121, %120 : vector<8x128xf32>
    %123 = arith.divf %121, %122 : vector<8x128xf32>
    %124 = vector.extract_strided_slice %117 {offsets = [0, 128], sizes = [8, 128], strides = [1, 1]} : vector<8x512xf32> to vector<8x128xf32>
    %125 = arith.negf %124 : vector<8x128xf32>
    %126 = math.exp %125 : vector<8x128xf32>
    %cst_39 = arith.constant 1.000000e+00 : f32
    %127 = vector.broadcast %cst_39 : f32 to vector<8x128xf32>
    %128 = arith.addf %127, %126 : vector<8x128xf32>
    %129 = arith.divf %127, %128 : vector<8x128xf32>
    %130 = vector.extract_strided_slice %117 {offsets = [0, 256], sizes = [8, 128], strides = [1, 1]} : vector<8x512xf32> to vector<8x128xf32>
    %131 = math.tanh %130 : vector<8x128xf32>
    %132 = vector.extract_strided_slice %117 {offsets = [0, 384], sizes = [8, 128], strides = [1, 1]} : vector<8x512xf32> to vector<8x128xf32>
    %133 = arith.negf %132 : vector<8x128xf32>
    %134 = math.exp %133 : vector<8x128xf32>
    %cst_40 = arith.constant 1.000000e+00 : f32
    %135 = vector.broadcast %cst_40 : f32 to vector<8x128xf32>
    %136 = arith.addf %135, %134 : vector<8x128xf32>
    %137 = arith.divf %135, %136 : vector<8x128xf32>
    %138 = arith.mulf %129, %107 : vector<8x128xf32>
    %139 = arith.mulf %123, %131 : vector<8x128xf32>
    %140 = arith.addf %138, %139 : vector<8x128xf32>
    %141 = math.tanh %140 : vector<8x128xf32>
    %142 = arith.mulf %137, %141 : vector<8x128xf32>
    %143 = arith.index_cast %113 : i32 to index
    %c0_41 = arith.constant 0 : index
    %144 = vector.load %arg5[%143, %c0_41] : memref<64x128xf32, #tpu.memory_space<vmem>>, vector<8x128xf32>
    tpu.vector_store %arg5[%143, %c0_41], %142 {strides = array<i32>} : memref<64x128xf32, #tpu.memory_space<vmem>>, vector<8x128xf32>,
    %c4_i32 = arith.constant 4 : i32
    %c8_i32_42 = arith.constant 8 : i32
    %145 = arith.muli %c4_i32, %c8_i32_42 : i32
    %146 = tpu.assume_multiple %145, 8 : i32
    %147 = arith.index_cast %146 : i32 to index
    %c0_43 = arith.constant 0 : index
    %148 = vector.load %arg8[%147, %c0_43] : memref<64x512xf32, #tpu.memory_space<vmem>>, vector<8x512xf32>
    %cst_44 = arith.constant dense<0.000000e+00> : vector<8x512xf32>
    %149 = tpu.matmul %142, %10, %cst_44 {dimension_numbers = #tpu.dot_dimension_numbers<[1], [0], [0], [1], [0, 0, 1, 1], [], []>} : vector<8x128xf32>, vector<128x512xf32>, vector<8x512xf32> -> vector<8x512xf32>
    %150 = arith.addf %148, %149 : vector<8x512xf32>
    %151 = vector.extract_strided_slice %150 {offsets = [0, 0], sizes = [8, 128], strides = [1, 1]} : vector<8x512xf32> to vector<8x128xf32>
    %152 = arith.negf %151 : vector<8x128xf32>
    %153 = math.exp %152 : vector<8x128xf32>
    %cst_45 = arith.constant 1.000000e+00 : f32
    %154 = vector.broadcast %cst_45 : f32 to vector<8x128xf32>
    %155 = arith.addf %154, %153 : vector<8x128xf32>
    %156 = arith.divf %154, %155 : vector<8x128xf32>
    %157 = vector.extract_strided_slice %150 {offsets = [0, 128], sizes = [8, 128], strides = [1, 1]} : vector<8x512xf32> to vector<8x128xf32>
    %158 = arith.negf %157 : vector<8x128xf32>
    %159 = math.exp %158 : vector<8x128xf32>
    %cst_46 = arith.constant 1.000000e+00 : f32
    %160 = vector.broadcast %cst_46 : f32 to vector<8x128xf32>
    %161 = arith.addf %160, %159 : vector<8x128xf32>
    %162 = arith.divf %160, %161 : vector<8x128xf32>
    %163 = vector.extract_strided_slice %150 {offsets = [0, 256], sizes = [8, 128], strides = [1, 1]} : vector<8x512xf32> to vector<8x128xf32>
    %164 = math.tanh %163 : vector<8x128xf32>
    %165 = vector.extract_strided_slice %150 {offsets = [0, 384], sizes = [8, 128], strides = [1, 1]} : vector<8x512xf32> to vector<8x128xf32>
    %166 = arith.negf %165 : vector<8x128xf32>
    %167 = math.exp %166 : vector<8x128xf32>
    %cst_47 = arith.constant 1.000000e+00 : f32
    %168 = vector.broadcast %cst_47 : f32 to vector<8x128xf32>
    %169 = arith.addf %168, %167 : vector<8x128xf32>
    %170 = arith.divf %168, %169 : vector<8x128xf32>
    %171 = arith.mulf %162, %140 : vector<8x128xf32>
    %172 = arith.mulf %156, %164 : vector<8x128xf32>
    %173 = arith.addf %171, %172 : vector<8x128xf32>
    %174 = math.tanh %173 : vector<8x128xf32>
    %175 = arith.mulf %170, %174 : vector<8x128xf32>
    %176 = arith.index_cast %146 : i32 to index
    %c0_48 = arith.constant 0 : index
    %177 = vector.load %arg5[%176, %c0_48] : memref<64x128xf32, #tpu.memory_space<vmem>>, vector<8x128xf32>
    tpu.vector_store %arg5[%176, %c0_48], %175 {strides = array<i32>} : memref<64x128xf32, #tpu.memory_space<vmem>>, vector<8x128xf32>,
    %c5_i32 = arith.constant 5 : i32
    %c8_i32_49 = arith.constant 8 : i32
    %178 = arith.muli %c5_i32, %c8_i32_49 : i32
    %179 = tpu.assume_multiple %178, 8 : i32
    %180 = arith.index_cast %179 : i32 to index
    %c0_50 = arith.constant 0 : index
    %181 = vector.load %arg8[%180, %c0_50] : memref<64x512xf32, #tpu.memory_space<vmem>>, vector<8x512xf32>
    %cst_51 = arith.constant dense<0.000000e+00> : vector<8x512xf32>
    %182 = tpu.matmul %175, %10, %cst_51 {dimension_numbers = #tpu.dot_dimension_numbers<[1], [0], [0], [1], [0, 0, 1, 1], [], []>} : vector<8x128xf32>, vector<128x512xf32>, vector<8x512xf32> -> vector<8x512xf32>
    %183 = arith.addf %181, %182 : vector<8x512xf32>
    %184 = vector.extract_strided_slice %183 {offsets = [0, 0], sizes = [8, 128], strides = [1, 1]} : vector<8x512xf32> to vector<8x128xf32>
    %185 = arith.negf %184 : vector<8x128xf32>
    %186 = math.exp %185 : vector<8x128xf32>
    %cst_52 = arith.constant 1.000000e+00 : f32
    %187 = vector.broadcast %cst_52 : f32 to vector<8x128xf32>
    %188 = arith.addf %187, %186 : vector<8x128xf32>
    %189 = arith.divf %187, %188 : vector<8x128xf32>
    %190 = vector.extract_strided_slice %183 {offsets = [0, 128], sizes = [8, 128], strides = [1, 1]} : vector<8x512xf32> to vector<8x128xf32>
    %191 = arith.negf %190 : vector<8x128xf32>
    %192 = math.exp %191 : vector<8x128xf32>
    %cst_53 = arith.constant 1.000000e+00 : f32
    %193 = vector.broadcast %cst_53 : f32 to vector<8x128xf32>
    %194 = arith.addf %193, %192 : vector<8x128xf32>
    %195 = arith.divf %193, %194 : vector<8x128xf32>
    %196 = vector.extract_strided_slice %183 {offsets = [0, 256], sizes = [8, 128], strides = [1, 1]} : vector<8x512xf32> to vector<8x128xf32>
    %197 = math.tanh %196 : vector<8x128xf32>
    %198 = vector.extract_strided_slice %183 {offsets = [0, 384], sizes = [8, 128], strides = [1, 1]} : vector<8x512xf32> to vector<8x128xf32>
    %199 = arith.negf %198 : vector<8x128xf32>
    %200 = math.exp %199 : vector<8x128xf32>
    %cst_54 = arith.constant 1.000000e+00 : f32
    %201 = vector.broadcast %cst_54 : f32 to vector<8x128xf32>
    %202 = arith.addf %201, %200 : vector<8x128xf32>
    %203 = arith.divf %201, %202 : vector<8x128xf32>
    %204 = arith.mulf %195, %173 : vector<8x128xf32>
    %205 = arith.mulf %189, %197 : vector<8x128xf32>
    %206 = arith.addf %204, %205 : vector<8x128xf32>
    %207 = math.tanh %206 : vector<8x128xf32>
    %208 = arith.mulf %203, %207 : vector<8x128xf32>
    %209 = arith.index_cast %179 : i32 to index
    %c0_55 = arith.constant 0 : index
    %210 = vector.load %arg5[%209, %c0_55] : memref<64x128xf32, #tpu.memory_space<vmem>>, vector<8x128xf32>
    tpu.vector_store %arg5[%209, %c0_55], %208 {strides = array<i32>} : memref<64x128xf32, #tpu.memory_space<vmem>>, vector<8x128xf32>,
    %c6_i32 = arith.constant 6 : i32
    %c8_i32_56 = arith.constant 8 : i32
    %211 = arith.muli %c6_i32, %c8_i32_56 : i32
    %212 = tpu.assume_multiple %211, 8 : i32
    %213 = arith.index_cast %212 : i32 to index
    %c0_57 = arith.constant 0 : index
    %214 = vector.load %arg8[%213, %c0_57] : memref<64x512xf32, #tpu.memory_space<vmem>>, vector<8x512xf32>
    %cst_58 = arith.constant dense<0.000000e+00> : vector<8x512xf32>
    %215 = tpu.matmul %208, %10, %cst_58 {dimension_numbers = #tpu.dot_dimension_numbers<[1], [0], [0], [1], [0, 0, 1, 1], [], []>} : vector<8x128xf32>, vector<128x512xf32>, vector<8x512xf32> -> vector<8x512xf32>
    %216 = arith.addf %214, %215 : vector<8x512xf32>
    %217 = vector.extract_strided_slice %216 {offsets = [0, 0], sizes = [8, 128], strides = [1, 1]} : vector<8x512xf32> to vector<8x128xf32>
    %218 = arith.negf %217 : vector<8x128xf32>
    %219 = math.exp %218 : vector<8x128xf32>
    %cst_59 = arith.constant 1.000000e+00 : f32
    %220 = vector.broadcast %cst_59 : f32 to vector<8x128xf32>
    %221 = arith.addf %220, %219 : vector<8x128xf32>
    %222 = arith.divf %220, %221 : vector<8x128xf32>
    %223 = vector.extract_strided_slice %216 {offsets = [0, 128], sizes = [8, 128], strides = [1, 1]} : vector<8x512xf32> to vector<8x128xf32>
    %224 = arith.negf %223 : vector<8x128xf32>
    %225 = math.exp %224 : vector<8x128xf32>
    %cst_60 = arith.constant 1.000000e+00 : f32
    %226 = vector.broadcast %cst_60 : f32 to vector<8x128xf32>
    %227 = arith.addf %226, %225 : vector<8x128xf32>
    %228 = arith.divf %226, %227 : vector<8x128xf32>
    %229 = vector.extract_strided_slice %216 {offsets = [0, 256], sizes = [8, 128], strides = [1, 1]} : vector<8x512xf32> to vector<8x128xf32>
    %230 = math.tanh %229 : vector<8x128xf32>
    %231 = vector.extract_strided_slice %216 {offsets = [0, 384], sizes = [8, 128], strides = [1, 1]} : vector<8x512xf32> to vector<8x128xf32>
    %232 = arith.negf %231 : vector<8x128xf32>
    %233 = math.exp %232 : vector<8x128xf32>
    %cst_61 = arith.constant 1.000000e+00 : f32
    %234 = vector.broadcast %cst_61 : f32 to vector<8x128xf32>
    %235 = arith.addf %234, %233 : vector<8x128xf32>
    %236 = arith.divf %234, %235 : vector<8x128xf32>
    %237 = arith.mulf %228, %206 : vector<8x128xf32>
    %238 = arith.mulf %222, %230 : vector<8x128xf32>
    %239 = arith.addf %237, %238 : vector<8x128xf32>
    %240 = math.tanh %239 : vector<8x128xf32>
    %241 = arith.mulf %236, %240 : vector<8x128xf32>
    %242 = arith.index_cast %212 : i32 to index
    %c0_62 = arith.constant 0 : index
    %243 = vector.load %arg5[%242, %c0_62] : memref<64x128xf32, #tpu.memory_space<vmem>>, vector<8x128xf32>
    tpu.vector_store %arg5[%242, %c0_62], %241 {strides = array<i32>} : memref<64x128xf32, #tpu.memory_space<vmem>>, vector<8x128xf32>,
    %c7_i32 = arith.constant 7 : i32
    %c8_i32_63 = arith.constant 8 : i32
    %244 = arith.muli %c7_i32, %c8_i32_63 : i32
    %245 = tpu.assume_multiple %244, 8 : i32
    %246 = arith.index_cast %245 : i32 to index
    %c0_64 = arith.constant 0 : index
    %247 = vector.load %arg8[%246, %c0_64] : memref<64x512xf32, #tpu.memory_space<vmem>>, vector<8x512xf32>
    %cst_65 = arith.constant dense<0.000000e+00> : vector<8x512xf32>
    %248 = tpu.matmul %241, %10, %cst_65 {dimension_numbers = #tpu.dot_dimension_numbers<[1], [0], [0], [1], [0, 0, 1, 1], [], []>} : vector<8x128xf32>, vector<128x512xf32>, vector<8x512xf32> -> vector<8x512xf32>
    %249 = arith.addf %247, %248 : vector<8x512xf32>
    %250 = vector.extract_strided_slice %249 {offsets = [0, 0], sizes = [8, 128], strides = [1, 1]} : vector<8x512xf32> to vector<8x128xf32>
    %251 = arith.negf %250 : vector<8x128xf32>
    %252 = math.exp %251 : vector<8x128xf32>
    %cst_66 = arith.constant 1.000000e+00 : f32
    %253 = vector.broadcast %cst_66 : f32 to vector<8x128xf32>
    %254 = arith.addf %253, %252 : vector<8x128xf32>
    %255 = arith.divf %253, %254 : vector<8x128xf32>
    %256 = vector.extract_strided_slice %249 {offsets = [0, 128], sizes = [8, 128], strides = [1, 1]} : vector<8x512xf32> to vector<8x128xf32>
    %257 = arith.negf %256 : vector<8x128xf32>
    %258 = math.exp %257 : vector<8x128xf32>
    %cst_67 = arith.constant 1.000000e+00 : f32
    %259 = vector.broadcast %cst_67 : f32 to vector<8x128xf32>
    %260 = arith.addf %259, %258 : vector<8x128xf32>
    %261 = arith.divf %259, %260 : vector<8x128xf32>
    %262 = vector.extract_strided_slice %249 {offsets = [0, 256], sizes = [8, 128], strides = [1, 1]} : vector<8x512xf32> to vector<8x128xf32>
    %263 = math.tanh %262 : vector<8x128xf32>
    %264 = vector.extract_strided_slice %249 {offsets = [0, 384], sizes = [8, 128], strides = [1, 1]} : vector<8x512xf32> to vector<8x128xf32>
    %265 = arith.negf %264 : vector<8x128xf32>
    %266 = math.exp %265 : vector<8x128xf32>
    %cst_68 = arith.constant 1.000000e+00 : f32
    %267 = vector.broadcast %cst_68 : f32 to vector<8x128xf32>
    %268 = arith.addf %267, %266 : vector<8x128xf32>
    %269 = arith.divf %267, %268 : vector<8x128xf32>
    %270 = arith.mulf %261, %239 : vector<8x128xf32>
    %271 = arith.mulf %255, %263 : vector<8x128xf32>
    %272 = arith.addf %270, %271 : vector<8x128xf32>
    %273 = math.tanh %272 : vector<8x128xf32>
    %274 = arith.mulf %269, %273 : vector<8x128xf32>
    %275 = arith.index_cast %245 : i32 to index
    %c0_69 = arith.constant 0 : index
    %276 = vector.load %arg5[%275, %c0_69] : memref<64x128xf32, #tpu.memory_space<vmem>>, vector<8x128xf32>
    tpu.vector_store %arg5[%275, %c0_69], %274 {strides = array<i32>} : memref<64x128xf32, #tpu.memory_space<vmem>>, vector<8x128xf32>,
    %c8_i32_70 = arith.constant 8 : i32
    %c0_71 = arith.constant 0 : index
    %c0_72 = arith.constant 0 : index
    %277 = vector.load %arg6[%c0_71, %c0_72] : memref<8x128xf32, #tpu.memory_space<vmem>>, vector<8x128xf32>
    tpu.vector_store %arg6[%c0_71, %c0_72], %274 {strides = array<i32>} : memref<8x128xf32, #tpu.memory_space<vmem>>, vector<8x128xf32>,
    %c0_73 = arith.constant 0 : index
    %c0_74 = arith.constant 0 : index
    %278 = vector.load %arg7[%c0_73, %c0_74] : memref<8x128xf32, #tpu.memory_space<vmem>>, vector<8x128xf32>
    tpu.vector_store %arg7[%c0_73, %c0_74], %272 {strides = array<i32>} : memref<8x128xf32, #tpu.memory_space<vmem>>, vector<8x128xf32>,
    return
  }
  func.func @transform_0(%arg0: i32) -> (i32, i32) {
    %c0_i32 = arith.constant 0 : i32
    %c0_i32_0 = arith.constant 0 : i32
    return %arg0, %c0_i32 : i32, i32
  }
  func.func @transform_1(%arg0: i32) -> (i32, i32) {
    %c0_i32 = arith.constant 0 : i32
    %c0_i32_0 = arith.constant 0 : i32
    %c0_i32_1 = arith.constant 0 : i32
    return %c0_i32, %c0_i32_0 : i32, i32
  }
  func.func @transform_2(%arg0: i32) -> (i32, i32) {
    %c0_i32 = arith.constant 0 : i32
    %c0_i32_0 = arith.constant 0 : i32
    %c0_i32_1 = arith.constant 0 : i32
    return %c0_i32, %c0_i32_0 : i32, i32
  }
  func.func @transform_3(%arg0: i32) -> (i32, i32) {
    %c0_i32 = arith.constant 0 : i32
    %c0_i32_0 = arith.constant 0 : i32
    %c0_i32_1 = arith.constant 0 : i32
    return %c0_i32, %c0_i32_0 : i32, i32
  }
  func.func @transform_4(%arg0: i32) -> (i32, i32) {
    %c0_i32 = arith.constant 0 : i32
    %c0_i32_0 = arith.constant 0 : i32
    return %arg0, %c0_i32 : i32, i32
  }
}

</mosaic_0001>

<llo_original>
// kernel: tpu_custom_call.1
$region0: #{tpu_custom_call.1}
  #allocation0 [shape = 'u32[]', space=smem, size = 0x4, offset = 0x4, fixed_abs, tag = 'smem constant byte address 0x4 - core index']
  #allocation1 [shape = 'u32[144,128]{1,0:T(1,128)}', space=vmem, size = 0x12000, scoped, tag = 'internal scratch']
  #allocation2 [shape = 'f32[8,128]{1,0:T(8,128)}', space=vmem, size = 0x1000, scoped, tag = 'scratch operand']
  #allocation3 [shape = 'f32[8,128]{1,0:T(8,128)}', space=vmem, size = 0x1000, scoped, tag = 'scratch operand']
  #allocation4 [shape = 'f32[64,512]{1,0:T(8,128)}', space=vmem, size = 0x20000, scoped, tag = 'scratch operand']
  %s0 = inlined_call_operand.hbm [shape: f32[64,128], index: 0, kind: input, shape index: {}]
  %s1 = inlined_call_operand.hbm [shape: f32[128,512], index: 1, kind: input, shape index: {}]
  %s2 = inlined_call_operand.hbm [shape: f32[128,512], index: 2, kind: input, shape index: {}]
  %s3 = inlined_call_operand.hbm [shape: f32[1,512], index: 3, kind: input, shape index: {}]
  %s4 = inlined_call_operand.hbm [shape: f32[64,128], index: 4, kind: output, shape index: {}]
  %s5 = sld [smem:[#allocation0]]
  $region46: #{tpu_custom_call.1} parent=0
    _
  %s7 = ssub.s32 1, %s5
  %s8 = scalar_select 0, %s7, %s5
  $region1: #{tpu_custom_call.1} parent=0
    #allocation5 [shape = 'u8[32768]{0}', space=vmem, size = 0x8000, scoped, tag = 'input window, operand 0, single buffered']
    #allocation6 [shape = 's32[1]{0}', space=sflag, size = 0x4, scoped, tag = 'scoped memory for tpu_custom_call.1']
    #allocation7 [shape = 's32[1]{0}', space=sflag, size = 0x4, scoped, tag = 'scoped memory for tpu_custom_call.1']
    #allocation8 [shape = 'u8[262144]{0}', space=vmem, size = 0x40000, scoped, tag = 'input window, operand 1, single buffered']
    #allocation9 [shape = 's32[1]{0}', space=sflag, size = 0x4, scoped, tag = 'scoped memory for tpu_custom_call.1']
    #allocation10 [shape = 'u8[262144]{0}', space=vmem, size = 0x40000, scoped, tag = 'input window, operand 2, single buffered']
    #allocation11 [shape = 'u8[2048]{0}', space=vmem, size = 0x800, scoped, tag = 'input window, operand 3, single buffered']
    #allocation12 [shape = 's32[1]{0}', space=sflag, size = 0x4, scoped, tag = 'scoped memory for tpu_custom_call.1']
    #allocation13 [shape = 'u8[32768]{0}', space=vmem, size = 0x8000, scoped, tag = 'output window, operand 0, single buffered']
    %9 = vsyncpa [#allocation6], 0
    %10 = vsyncpa [#allocation9], 0
    %11 = vsyncpa [#allocation12], 0
    %12 = vsyncpa [#allocation7], 0
    // Predicated region
    $region2: #{tpu_custom_call.1} parent=1 // pred_check
      _
    $region3: #{tpu_custom_call.1} parent=1 // pred_check_branch
      %14 = sbr.rel (0) target = $region5
    $region4: #{tpu_custom_call.1} parent=1 // pred_region
      %s16 = ssub.s32 1024, 1024
      %17 = vsyncadd [#allocation6], %s16
      %s18 = sshll.u32 [#allocation5], 4
      %s19 = int_to_ptr.vmem [resolvable:$true] %s18
      %24 = dma.hbm_to_vmem [thread:$0]  %s0, 1024, %s19, [#allocation6], 128, 128, 8
    $region5: #{tpu_custom_call.1} parent=1 // pred_fallthru
      _
    // Predicated region
    $region6: #{tpu_custom_call.1} parent=1 // pred_check
      _
    $region7: #{tpu_custom_call.1} parent=1 // pred_check_branch
      %26 = sbr.rel (0) target = $region9
    $region8: #{tpu_custom_call.1} parent=1 // pred_region
      %s28 = ssub.s32 8192, 8192
      %29 = vsyncadd [#allocation9], %s28
      %s30 = sshll.u32 [#allocation8], 4
      %s31 = int_to_ptr.vmem [resolvable:$true] %s30
      %36 = dma.hbm_to_vmem [thread:$0]  %s1, 8192, %s31, [#allocation9], 512, 512, 32
    $region9: #{tpu_custom_call.1} parent=1 // pred_fallthru
      _
    // Predicated region
    $region10: #{tpu_custom_call.1} parent=1 // pred_check
      _
    $region11: #{tpu_custom_call.1} parent=1 // pred_check_branch
      %38 = sbr.rel (0) target = $region13
    $region12: #{tpu_custom_call.1} parent=1 // pred_region
      %s40 = ssub.s32 8192, 8192
      %41 = vsyncadd [#allocation9], %s40
      %s42 = sshll.u32 [#allocation10], 4
      %s43 = int_to_ptr.vmem [resolvable:$true] %s42
      %48 = dma.hbm_to_vmem [thread:$0]  %s2, 8192, %s43, [#allocation9], 512, 512, 32
    $region13: #{tpu_custom_call.1} parent=1 // pred_fallthru
      _
    // Predicated region
    $region14: #{tpu_custom_call.1} parent=1 // pred_check
      _
    $region15: #{tpu_custom_call.1} parent=1 // pred_check_branch
      %50 = sbr.rel (0) target = $region17
    $region16: #{tpu_custom_call.1} parent=1 // pred_region
      %s52 = ssub.s32 64, 64
      %53 = vsyncadd [#allocation12], %s52
      %s55 = sshll.u32 [#allocation11], 4
      %s56 = int_to_ptr.vmem [resolvable:$true] %s55
      %58 = dma.hbm_to_vmem [thread:$0]  %s3, 64, %s56, [#allocation12]
    $region17: #{tpu_custom_call.1} parent=1 // pred_fallthru
      _
    // Predicated region
    $region18: #{tpu_custom_call.1} parent=1 // pred_check
      _
    $region19: #{tpu_custom_call.1} parent=1 // pred_check_branch
      %60 = sbr.rel (0) target = $region21
    $region20: #{tpu_custom_call.1} parent=1 // pred_region
      %61 = dma.done [#allocation6], 1024
    $region21: #{tpu_custom_call.1} parent=1 // pred_fallthru
      _
    // Predicated region
    $region22: #{tpu_custom_call.1} parent=1 // pred_check
      _
    $region23: #{tpu_custom_call.1} parent=1 // pred_check_branch
      %63 = sbr.rel (0) target = $region25
    $region24: #{tpu_custom_call.1} parent=1 // pred_region
      %64 = dma.done [#allocation9], 8192
    $region25: #{tpu_custom_call.1} parent=1 // pred_fallthru
      _
    // Predicated region
    $region26: #{tpu_custom_call.1} parent=1 // pred_check
      _
    $region27: #{tpu_custom_call.1} parent=1 // pred_check_branch
      %66 = sbr.rel (0) target = $region29
    $region28: #{tpu_custom_call.1} parent=1 // pred_region
      %67 = dma.done [#allocation9], 8192
    $region29: #{tpu_custom_call.1} parent=1 // pred_fallthru
      _
    // Predicated region
    $region30: #{tpu_custom_call.1} parent=1 // pred_check
      _
    $region31: #{tpu_custom_call.1} parent=1 // pred_check_branch
      %69 = sbr.rel (0) target = $region33
    $region32: #{tpu_custom_call.1} parent=1 // pred_region
      %70 = dma.done [#allocation12], 64
    $region33: #{tpu_custom_call.1} parent=1 // pred_fallthru
      _
    %p71 = scmp.eq.s32.totalorder 0, 0
    // Predicated region
    $region34: #{tpu_custom_call.1} parent=1 // pred_check
      %p72 = pneg %p71
    $region35: #{tpu_custom_call.1} parent=1 // pred_check_branch
      %74 = sbr.rel (%p72) target = $region37
    $region36: #{tpu_custom_call.1} parent=1 // pred_region
      %75 = vst [vmem:[#allocation2] sm:$0xff] 0.0
      %76 = vst [vmem:[#allocation3] sm:$0xff] 0.0
    $region37: #{tpu_custom_call.1} parent=1 // pred_fallthru
      _
    %v77 = vld [vmem:[#allocation5] sm:$0xff]
    %v78 = vld [vmem:[#allocation5 + $0x8] sm:$0xff]
    %v79 = vld [vmem:[#allocation5 + $0x10] sm:$0xff]
    %v80 = vld [vmem:[#allocation5 + $0x18] sm:$0xff]
    %v81 = vld [vmem:[#allocation5 + $0x20] sm:$0xff]
    %v82 = vld [vmem:[#allocation5 + $0x28] sm:$0xff]
    %v83 = vld [vmem:[#allocation5 + $0x30] sm:$0xff]
    %v84 = vld [vmem:[#allocation5 + $0x38] sm:$0xff]
    %v85 = vld [vmem:[#allocation8] sm:$0xff]
    %v86 = vld [vmem:[#allocation8 + $0x8] sm:$0xff]
    %v87 = vld [vmem:[#allocation8 + $0x10] sm:$0xff]
    %v88 = vld [vmem:[#allocation8 + $0x18] sm:$0xff]
    %v89 = vld [vmem:[#allocation8 + $0x20] sm:$0xff]
    %v90 = vld [vmem:[#allocation8 + $0x28] sm:$0xff]
    %v91 = vld [vmem:[#allocation8 + $0x30] sm:$0xff]
    %v92 = vld [vmem:[#allocation8 + $0x38] sm:$0xff]
    %v93 = vld [vmem:[#allocation8 + $0x40] sm:$0xff]
    %v94 = vld [vmem:[#allocation8 + $0x48] sm:$0xff]
    %v95 = vld [vmem:[#allocation8 + $0x50] sm:$0xff]
    %v96 = vld [vmem:[#allocation8 + $0x58] sm:$0xff]
    %v97 = vld [vmem:[#allocation8 + $0x60] sm:$0xff]
    %v98 = vld [vmem:[#allocation8 + $0x68] sm:$0xff]
    %v99 = vld [vmem:[#allocation8 + $0x70] sm:$0xff]
    %v100 = vld [vmem:[#allocation8 + $0x78] sm:$0xff]
    %v101 = vld [vmem:[#allocation8 + $0x80] sm:$0xff]
    %v102 = vld [vmem:[#allocation8 + $0x88] sm:$0xff]
    %v103 = vld [vmem:[#allocation8 + $0x90] sm:$0xff]
    %v104 = vld [vmem:[#allocation8 + $0x98] sm:$0xff]
    %v105 = vld [vmem:[#allocation8 + $0xa0] sm:$0xff]
    %v106 = vld [vmem:[#allocation8 + $0xa8] sm:$0xff]
    %v107 = vld [vmem:[#allocation8 + $0xb0] sm:$0xff]
    %v108 = vld [vmem:[#allocation8 + $0xb8] sm:$0xff]
    %v109 = vld [vmem:[#allocation8 + $0xc0] sm:$0xff]
    %v110 = vld [vmem:[#allocation8 + $0xc8] sm:$0xff]
    %v111 = vld [vmem:[#allocation8 + $0xd0] sm:$0xff]
    %v112 = vld [vmem:[#allocation8 + $0xd8] sm:$0xff]
    %v113 = vld [vmem:[#allocation8 + $0xe0] sm:$0xff]
    %v114 = vld [vmem:[#allocation8 + $0xe8] sm:$0xff]
    %v115 = vld [vmem:[#allocation8 + $0xf0] sm:$0xff]
    %v116 = vld [vmem:[#allocation8 + $0xf8] sm:$0xff]
    %v117 = vld [vmem:[#allocation8 + $0x100] sm:$0xff]
    %v118 = vld [vmem:[#allocation8 + $0x108] sm:$0xff]
    %v119 = vld [vmem:[#allocation8 + $0x110] sm:$0xff]
    %v120 = vld [vmem:[#allocation8 + $0x118] sm:$0xff]
    %v121 = vld [vmem:[#allocation8 + $0x120] sm:$0xff]
    %v122 = vld [vmem:[#allocation8 + $0x128] sm:$0xff]
    %v123 = vld [vmem:[#allocation8 + $0x130] sm:$0xff]
    %v124 = vld [vmem:[#allocation8 + $0x138] sm:$0xff]
    %v125 = vld [vmem:[#allocation8 + $0x140] sm:$0xff]
    %v126 = vld [vmem:[#allocation8 + $0x148] sm:$0xff]
    %v127 = vld [vmem:[#allocation8 + $0x150] sm:$0xff]
    %v128 = vld [vmem:[#allocation8 + $0x158] sm:$0xff]
    %v129 = vld [vmem:[#allocation8 + $0x160] sm:$0xff]
    %v130 = vld [vmem:[#allocation8 + $0x168] sm:$0xff]
    %v131 = vld [vmem:[#allocation8 + $0x170] sm:$0xff]
    %v132 = vld [vmem:[#allocation8 + $0x178] sm:$0xff]
    %v133 = vld [vmem:[#allocation8 + $0x180] sm:$0xff]
    %v134 = vld [vmem:[#allocation8 + $0x188] sm:$0xff]
    %v135 = vld [vmem:[#allocation8 + $0x190] sm:$0xff]
    %v136 = vld [vmem:[#allocation8 + $0x198] sm:$0xff]
    %v137 = vld [vmem:[#allocation8 + $0x1a0] sm:$0xff]
    %v138 = vld [vmem:[#allocation8 + $0x1a8] sm:$0xff]
    %v139 = vld [vmem:[#allocation8 + $0x1b0] sm:$0xff]
    %v140 = vld [vmem:[#allocation8 + $0x1b8] sm:$0xff]
    %v141 = vld [vmem:[#allocation8 + $0x1c0] sm:$0xff]
    %v142 = vld [vmem:[#allocation8 + $0x1c8] sm:$0xff]
    %v143 = vld [vmem:[#allocation8 + $0x1d0] sm:$0xff]
    %v144 = vld [vmem:[#allocation8 + $0x1d8] sm:$0xff]
    %v145 = vld [vmem:[#allocation8 + $0x1e0] sm:$0xff]
    %v146 = vld [vmem:[#allocation8 + $0x1e8] sm:$0xff]
    %v147 = vld [vmem:[#allocation8 + $0x1f0] sm:$0xff]
    %v148 = vld [vmem:[#allocation8 + $0x1f8] sm:$0xff]
    %v149 = vld [vmem:[#allocation11] sm:$0xf]
    %v151 = vlaneseq
    %v152 = vshrl.u32 %v151, 7
    %v153 = vsub.s32 0, %v152
    %v154 = vrot.slane %v149, %v153
    %v155 = vlaneseq
    %v156 = vshrl.u32 %v155, 7
    %v157 = vsub.s32 1, %v156
    %v158 = vrot.slane %v149, %v157
    %v159 = vlaneseq
    %v160 = vshrl.u32 %v159, 7
    %v161 = vsub.s32 2, %v160
    %v162 = vrot.slane %v149, %v161
    %v163 = vlaneseq
    %v164 = vshrl.u32 %v163, 7
    %v165 = vsub.s32 3, %v164
    %v166 = vrot.slane %v149, %v165
    %171 = vmatprep.subr.mxu0 %v86
    %172 = vmatpush1.msra.mxu0 %v85
    %173 = vmatprep.subr.mxu0 %v90
    %174 = vmatpush1.msra.mxu0 %v89
    %175 = vmatprep.subr.mxu0 %v94
    %176 = vmatpush1.msra.mxu0 %v93
    %177 = vmatprep.subr.mxu0 %v98
    %178 = vmatpush1.msra.mxu0 %v97
    %179 = vmatprep.subr.mxu0 %v102
    %180 = vmatpush1.msra.mxu0 %v101
    %181 = vmatprep.subr.mxu0 %v106
    %182 = vmatpush1.msra.mxu0 %v105
    %183 = vmatprep.subr.mxu0 %v110
    %184 = vmatpush1.msra.mxu0 %v109
    %185 = vmatprep.subr.mxu0 %v114
    %186 = vmatpush1.msra.mxu0 %v113
    %187 = vmatprep.subr.mxu0 %v118
    %188 = vmatpush1.msra.mxu0 %v117
    %189 = vmatprep.subr.mxu0 %v122
    %190 = vmatpush1.msra.mxu0 %v121
    %191 = vmatprep.subr.mxu0 %v126
    %192 = vmatpush1.msra.mxu0 %v125
    %193 = vmatprep.subr.mxu0 %v130
    %194 = vmatpush1.msra.mxu0 %v129
    %195 = vmatprep.subr.mxu0 %v134
    %196 = vmatpush1.msra.mxu0 %v133
    %197 = vmatprep.subr.mxu0 %v138
    %198 = vmatpush1.msra.mxu0 %v137
    %199 = vmatprep.subr.mxu0 %v142
    %200 = vmatpush1.msra.mxu0 %v141
    %201 = vmatprep.subr.mxu0 %v146
    %202 = vmatpush1.msra.mxu0 %v145
    %203 = vmatprep.subr.mxu0 0.0
    %204 = vmatpush1.msra.mxu0 0.0
    %205 = vmatprep.subr.mxu0 0.0
    %206 = vmatpush1.msra.mxu0 0.0
    %207 = vmatprep.subr.mxu0 0.0
    %208 = vmatpush1.msra.mxu0 0.0
    %209 = vmatprep.subr.mxu0 0.0
    %210 = vmatpush1.msra.mxu0 0.0
    %211 = vmatprep.subr.mxu0 0.0
    %212 = vmatpush1.msra.mxu0 0.0
    %213 = vmatprep.subr.mxu0 0.0
    %214 = vmatpush1.msra.mxu0 0.0
    %215 = vmatprep.subr.mxu0 0.0
    %216 = vmatpush1.msra.mxu0 0.0
    %217 = vmatprep.subr.mxu0 0.0
    %218 = vmatpush1.msra.mxu0 0.0
    %219 = vmatprep.subr.mxu0 0.0
    %220 = vmatpush1.msra.mxu0 0.0
    %221 = vmatprep.subr.mxu0 0.0
    %222 = vmatpush1.msra.mxu0 0.0
    %223 = vmatprep.subr.mxu0 0.0
    %224 = vmatpush1.msra.mxu0 0.0
    %225 = vmatprep.subr.mxu0 0.0
    %226 = vmatpush1.msra.mxu0 0.0
    %227 = vmatprep.subr.mxu0 0.0
    %228 = vmatpush1.msra.mxu0 0.0
    %229 = vmatprep.subr.mxu0 0.0
    %230 = vmatpush1.msra.mxu0 0.0
    %231 = vmatprep.subr.mxu0 0.0
    %232 = vmatpush1.msra.mxu0 0.0
    %233 = vmatprep.subr.mxu0 0.0
    %234 = vmatpush1.msra.mxu0 0.0
    %235 = vmatprep.mubr.f32.mxu0 0.0
    %236 = vmatmul.mubr.f32.gmra.mrb[0].mxu0 %v77
    %v237 = vpop.f32.mrb[0].mxu0
    %v238 = vadd.f32 %v154, %v237
    %v239 = vpop.f32.mrb[0].mxu0
    %v240 = vadd.f32 %v158, %v239
    %241 = vmatprep.mubr.f32.mxu0 0.0
    %242 = vmatmul.mubr.f32.gmra.mrb[0].mxu0 %v78
    %v243 = vpop.f32.mrb[0].mxu0
    %v244 = vadd.f32 %v154, %v243
    %v245 = vpop.f32.mrb[0].mxu0
    %v246 = vadd.f32 %v158, %v245
    %247 = vmatprep.mubr.f32.mxu0 0.0
    %248 = vmatmul.mubr.f32.gmra.mrb[0].mxu0 %v79
    %v249 = vpop.f32.mrb[0].mxu0
    %v250 = vadd.f32 %v154, %v249
    %v251 = vpop.f32.mrb[0].mxu0
    %v252 = vadd.f32 %v158, %v251
    %253 = vmatprep.mubr.f32.mxu0 0.0
    %254 = vmatmul.mubr.f32.gmra.mrb[0].mxu0 %v80
    %v255 = vpop.f32.mrb[0].mxu0
    %v256 = vadd.f32 %v154, %v255
    %v257 = vpop.f32.mrb[0].mxu0
    %v258 = vadd.f32 %v158, %v257
    %259 = vmatprep.mubr.f32.mxu0 0.0
    %260 = vmatmul.mubr.f32.gmra.mrb[0].mxu0 %v81
    %v261 = vpop.f32.mrb[0].mxu0
    %v262 = vadd.f32 %v154, %v261
    %v263 = vpop.f32.mrb[0].mxu0
    %v264 = vadd.f32 %v158, %v263
    %265 = vmatprep.mubr.f32.mxu0 0.0
    %266 = vmatmul.mubr.f32.gmra.mrb[0].mxu0 %v82
    %v267 = vpop.f32.mrb[0].mxu0
    %v268 = vadd.f32 %v154, %v267
    %v269 = vpop.f32.mrb[0].mxu0
    %v270 = vadd.f32 %v158, %v269
    %271 = vmatprep.mubr.f32.mxu0 0.0
    %272 = vmatmul.mubr.f32.gmra.mrb[0].mxu0 %v83
    %v273 = vpop.f32.mrb[0].mxu0
    %v274 = vadd.f32 %v154, %v273
    %v275 = vpop.f32.mrb[0].mxu0
    %v276 = vadd.f32 %v158, %v275
    %277 = vmatprep.mubr.f32.mxu0 0.0
    %278 = vmatmul.mubr.f32.gmra.mrb[0].mxu0 %v84
    %v279 = vpop.f32.mrb[0].mxu0
    %v280 = vadd.f32 %v154, %v279
    %v281 = vpop.f32.mrb[0].mxu0
    %v282 = vadd.f32 %v158, %v281
    %283 = vdwg.mxu0
    %284 = vmatprep.subr.mxu0 %v88
    %285 = vmatpush1.msra.mxu0 %v87
    %286 = vmatprep.subr.mxu0 %v92
    %287 = vmatpush1.msra.mxu0 %v91
    %288 = vmatprep.subr.mxu0 %v96
    %289 = vmatpush1.msra.mxu0 %v95
    %290 = vmatprep.subr.mxu0 %v100
    %291 = vmatpush1.msra.mxu0 %v99
    %292 = vmatprep.subr.mxu0 %v104
    %293 = vmatpush1.msra.mxu0 %v103
    %294 = vmatprep.subr.mxu0 %v108
    %295 = vmatpush1.msra.mxu0 %v107
    %296 = vmatprep.subr.mxu0 %v112
    %297 = vmatpush1.msra.mxu0 %v111
    %298 = vmatprep.subr.mxu0 %v116
    %299 = vmatpush1.msra.mxu0 %v115
    %300 = vmatprep.subr.mxu0 %v120
    %301 = vmatpush1.msra.mxu0 %v119
    %302 = vmatprep.subr.mxu0 %v124
    %303 = vmatpush1.msra.mxu0 %v123
    %304 = vmatprep.subr.mxu0 %v128
    %305 = vmatpush1.msra.mxu0 %v127
    %306 = vmatprep.subr.mxu0 %v132
    %307 = vmatpush1.msra.mxu0 %v131
    %308 = vmatprep.subr.mxu0 %v136
    %309 = vmatpush1.msra.mxu0 %v135
    %310 = vmatprep.subr.mxu0 %v140
    %311 = vmatpush1.msra.mxu0 %v139
    %312 = vmatprep.subr.mxu0 %v144
    %313 = vmatpush1.msra.mxu0 %v143
    %314 = vmatprep.subr.mxu0 %v148
    %315 = vmatpush1.msra.mxu0 %v147
    %316 = vmatprep.subr.mxu0 0.0
    %317 = vmatpush1.msra.mxu0 0.0
    %318 = vmatprep.subr.mxu0 0.0
    %319 = vmatpush1.msra.mxu0 0.0
    %320 = vmatprep.subr.mxu0 0.0
    %321 = vmatpush1.msra.mxu0 0.0
    %322 = vmatprep.subr.mxu0 0.0
    %323 = vmatpush1.msra.mxu0 0.0
    %324 = vmatprep.subr.mxu0 0.0
    %325 = vmatpush1.msra.mxu0 0.0
    %326 = vmatprep.subr.mxu0 0.0
    %327 = vmatpush1.msra.mxu0 0.0
    %328 = vmatprep.subr.mxu0 0.0
    %329 = vmatpush1.msra.mxu0 0.0
    %330 = vmatprep.subr.mxu0 0.0
    %331 = vmatpush1.msra.mxu0 0.0
    %332 = vmatprep.subr.mxu0 0.0
    %333 = vmatpush1.msra.mxu0 0.0
    %334 = vmatprep.subr.mxu0 0.0
    %335 = vmatpush1.msra.mxu0 0.0
    %336 = vmatprep.subr.mxu0 0.0
    %337 = vmatpush1.msra.mxu0 0.0
    %338 = vmatprep.subr.mxu0 0.0
    %339 = vmatpush1.msra.mxu0 0.0
    %340 = vmatprep.subr.mxu0 0.0
    %341 = vmatpush1.msra.mxu0 0.0
    %342 = vmatprep.subr.mxu0 0.0
    %343 = vmatpush1.msra.mxu0 0.0
    %344 = vmatprep.subr.mxu0 0.0
    %345 = vmatpush1.msra.mxu0 0.0
    %346 = vmatprep.subr.mxu0 0.0
    %347 = vmatpush1.msra.mxu0 0.0
    %348 = vmatprep.mubr.f32.mxu0 0.0
    %349 = vmatmul.mubr.f32.gmra.mrb[0].mxu0 %v77
    %v350 = vpop.f32.mrb[0].mxu0
    %v351 = vadd.f32 %v162, %v350
    %v352 = vpop.f32.mrb[0].mxu0
    %v353 = vadd.f32 %v166, %v352
    %354 = vmatprep.mubr.f32.mxu0 0.0
    %355 = vmatmul.mubr.f32.gmra.mrb[0].mxu0 %v78
    %v356 = vpop.f32.mrb[0].mxu0
    %v357 = vadd.f32 %v162, %v356
    %v358 = vpop.f32.mrb[0].mxu0
    %v359 = vadd.f32 %v166, %v358
    %360 = vmatprep.mubr.f32.mxu0 0.0
    %361 = vmatmul.mubr.f32.gmra.mrb[0].mxu0 %v79
    %v362 = vpop.f32.mrb[0].mxu0
    %v363 = vadd.f32 %v162, %v362
    %v364 = vpop.f32.mrb[0].mxu0
    %v365 = vadd.f32 %v166, %v364
    %366 = vmatprep.mubr.f32.mxu0 0.0
    %367 = vmatmul.mubr.f32.gmra.mrb[0].mxu0 %v80
    %v368 = vpop.f32.mrb[0].mxu0
    %v369 = vadd.f32 %v162, %v368
    %v370 = vpop.f32.mrb[0].mxu0
    %v371 = vadd.f32 %v166, %v370
    %372 = vmatprep.mubr.f32.mxu0 0.0
    %373 = vmatmul.mubr.f32.gmra.mrb[0].mxu0 %v81
    %v374 = vpop.f32.mrb[0].mxu0
    %v375 = vadd.f32 %v162, %v374
    %v376 = vpop.f32.mrb[0].mxu0
    %v377 = vadd.f32 %v166, %v376
    %378 = vmatprep.mubr.f32.mxu0 0.0
    %379 = vmatmul.mubr.f32.gmra.mrb[0].mxu0 %v82
    %v380 = vpop.f32.mrb[0].mxu0
    %v381 = vadd.f32 %v162, %v380
    %v382 = vpop.f32.mrb[0].mxu0
    %v383 = vadd.f32 %v166, %v382
    %384 = vmatprep.mubr.f32.mxu0 0.0
    %385 = vmatmul.mubr.f32.gmra.mrb[0].mxu0 %v83
    %v386 = vpop.f32.mrb[0].mxu0
    %v387 = vadd.f32 %v162, %v386
    %v388 = vpop.f32.mrb[0].mxu0
    %v389 = vadd.f32 %v166, %v388
    %390 = vmatprep.mubr.f32.mxu0 0.0
    %391 = vmatmul.mubr.f32.gmra.mrb[0].mxu0 %v84
    %v392 = vpop.f32.mrb[0].mxu0
    %v393 = vadd.f32 %v162, %v392
    %v394 = vpop.f32.mrb[0].mxu0
    %v395 = vadd.f32 %v166, %v394
    %396 = vdwg.mxu0
    %397 = vst [vmem:[#allocation4] sm:$0xff] %v238
    %398 = vst [vmem:[#allocation4 + $0x8] sm:$0xff] %v240
    %399 = vst [vmem:[#allocation4 + $0x10] sm:$0xff] %v351
    %400 = vst [vmem:[#allocation4 + $0x18] sm:$0xff] %v353
    %401 = vst [vmem:[#allocation4 + $0x20] sm:$0xff] %v244
    %402 = vst [vmem:[#allocation4 + $0x28] sm:$0xff] %v246
    %403 = vst [vmem:[#allocation4 + $0x30] sm:$0xff] %v357
    %404 = vst [vmem:[#allocation4 + $0x38] sm:$0xff] %v359
    %405 = vst [vmem:[#allocation4 + $0x40] sm:$0xff] %v250
    %406 = vst [vmem:[#allocation4 + $0x48] sm:$0xff] %v252
    %407 = vst [vmem:[#allocation4 + $0x50] sm:$0xff] %v363
    %408 = vst [vmem:[#allocation4 + $0x58] sm:$0xff] %v365
    %409 = vst [vmem:[#allocation4 + $0x60] sm:$0xff] %v256
    %410 = vst [vmem:[#allocation4 + $0x68] sm:$0xff] %v258
    %411 = vst [vmem:[#allocation4 + $0x70] sm:$0xff] %v369
    %412 = vst [vmem:[#allocation4 + $0x78] sm:$0xff] %v371
    %413 = vst [vmem:[#allocation4 + $0x80] sm:$0xff] %v262
    %414 = vst [vmem:[#allocation4 + $0x88] sm:$0xff] %v264
    %415 = vst [vmem:[#allocation4 + $0x90] sm:$0xff] %v375
    %416 = vst [vmem:[#allocation4 + $0x98] sm:$0xff] %v377
    %417 = vst [vmem:[#allocation4 + $0xa0] sm:$0xff] %v268
    %418 = vst [vmem:[#allocation4 + $0xa8] sm:$0xff] %v270
    %419 = vst [vmem:[#allocation4 + $0xb0] sm:$0xff] %v381
    %420 = vst [vmem:[#allocation4 + $0xb8] sm:$0xff] %v383
    %421 = vst [vmem:[#allocation4 + $0xc0] sm:$0xff] %v274
    %422 = vst [vmem:[#allocation4 + $0xc8] sm:$0xff] %v276
    %423 = vst [vmem:[#allocation4 + $0xd0] sm:$0xff] %v387
    %424 = vst [vmem:[#allocation4 + $0xd8] sm:$0xff] %v389
    %425 = vst [vmem:[#allocation4 + $0xe0] sm:$0xff] %v280
    %426 = vst [vmem:[#allocation4 + $0xe8] sm:$0xff] %v282
    %427 = vst [vmem:[#allocation4 + $0xf0] sm:$0xff] %v393
    %428 = vst [vmem:[#allocation4 + $0xf8] sm:$0xff] %v395
    %v429 = vld [vmem:[#allocation10] sm:$0xff]
    %v430 = vld [vmem:[#allocation10 + $0x8] sm:$0xff]
    %v431 = vld [vmem:[#allocation10 + $0x10] sm:$0xff]
    %v432 = vld [vmem:[#allocation10 + $0x18] sm:$0xff]
    %v433 = vld [vmem:[#allocation10 + $0x20] sm:$0xff]
    %v434 = vld [vmem:[#allocation10 + $0x28] sm:$0xff]
    %v435 = vld [vmem:[#allocation10 + $0x30] sm:$0xff]
    %v436 = vld [vmem:[#allocation10 + $0x38] sm:$0xff]
    %v437 = vld [vmem:[#allocation10 + $0x40] sm:$0xff]
    %v438 = vld [vmem:[#allocation10 + $0x48] sm:$0xff]
    %v439 = vld [vmem:[#allocation10 + $0x50] sm:$0xff]
    %v440 = vld [vmem:[#allocation10 + $0x58] sm:$0xff]
    %v441 = vld [vmem:[#allocation10 + $0x60] sm:$0xff]
    %v442 = vld [vmem:[#allocation10 + $0x68] sm:$0xff]
    %v443 = vld [vmem:[#allocation10 + $0x70] sm:$0xff]
    %v444 = vld [vmem:[#allocation10 + $0x78] sm:$0xff]
    %v445 = vld [vmem:[#allocation10 + $0x80] sm:$0xff]
    %v446 = vld [vmem:[#allocation10 + $0x88] sm:$0xff]
    %v447 = vld [vmem:[#allocation10 + $0x90] sm:$0xff]
    %v448 = vld [vmem:[#allocation10 + $0x98] sm:$0xff]
    %v449 = vld [vmem:[#allocation10 + $0xa0] sm:$0xff]
    %v450 = vld [vmem:[#allocation10 + $0xa8] sm:$0xff]
    %v451 = vld [vmem:[#allocation10 + $0xb0] sm:$0xff]
    %v452 = vld [vmem:[#allocation10 + $0xb8] sm:$0xff]
    %v453 = vld [vmem:[#allocation10 + $0xc0] sm:$0xff]
    %v454 = vld [vmem:[#allocation10 + $0xc8] sm:$0xff]
    %v455 = vld [vmem:[#allocation10 + $0xd0] sm:$0xff]
    %v456 = vld [vmem:[#allocation10 + $0xd8] sm:$0xff]
    %v457 = vld [vmem:[#allocation10 + $0xe0] sm:$0xff]
    %v458 = vld [vmem:[#allocation10 + $0xe8] sm:$0xff]
    %v459 = vld [vmem:[#allocation10 + $0xf0] sm:$0xff]
    %v460 = vld [vmem:[#allocation10 + $0xf8] sm:$0xff]
    %v461 = vld [vmem:[#allocation10 + $0x100] sm:$0xff]
    %v462 = vld [vmem:[#allocation10 + $0x108] sm:$0xff]
    %v463 = vld [vmem:[#allocation10 + $0x110] sm:$0xff]
    %v464 = vld [vmem:[#allocation10 + $0x118] sm:$0xff]
    %v465 = vld [vmem:[#allocation10 + $0x120] sm:$0xff]
    %v466 = vld [vmem:[#allocation10 + $0x128] sm:$0xff]
    %v467 = vld [vmem:[#allocation10 + $0x130] sm:$0xff]
    %v468 = vld [vmem:[#allocation10 + $0x138] sm:$0xff]
    %v469 = vld [vmem:[#allocation10 + $0x140] sm:$0xff]
    %v470 = vld [vmem:[#allocation10 + $0x148] sm:$0xff]
    %v471 = vld [vmem:[#allocation10 + $0x150] sm:$0xff]
    %v472 = vld [vmem:[#allocation10 + $0x158] sm:$0xff]
    %v473 = vld [vmem:[#allocation10 + $0x160] sm:$0xff]
    %v474 = vld [vmem:[#allocation10 + $0x168] sm:$0xff]
    %v475 = vld [vmem:[#allocation10 + $0x170] sm:$0xff]
    %v476 = vld [vmem:[#allocation10 + $0x178] sm:$0xff]
    %v477 = vld [vmem:[#allocation10 + $0x180] sm:$0xff]
    %v478 = vld [vmem:[#allocation10 + $0x188] sm:$0xff]
    %v479 = vld [vmem:[#allocation10 + $0x190] sm:$0xff]
    %v480 = vld [vmem:[#allocation10 + $0x198] sm:$0xff]
    %v481 = vld [vmem:[#allocation10 + $0x1a0] sm:$0xff]
    %v482 = vld [vmem:[#allocation10 + $0x1a8] sm:$0xff]
    %v483 = vld [vmem:[#allocation10 + $0x1b0] sm:$0xff]
    %v484 = vld [vmem:[#allocation10 + $0x1b8] sm:$0xff]
    %v485 = vld [vmem:[#allocation10 + $0x1c0] sm:$0xff]
    %v486 = vld [vmem:[#allocation10 + $0x1c8] sm:$0xff]
    %v487 = vld [vmem:[#allocation10 + $0x1d0] sm:$0xff]
    %v488 = vld [vmem:[#allocation10 + $0x1d8] sm:$0xff]
    %v489 = vld [vmem:[#allocation10 + $0x1e0] sm:$0xff]
    %v490 = vld [vmem:[#allocation10 + $0x1e8] sm:$0xff]
    %v491 = vld [vmem:[#allocation10 + $0x1f0] sm:$0xff]
    %v492 = vld [vmem:[#allocation10 + $0x1f8] sm:$0xff]
    %v493 = vld [vmem:[#allocation2] sm:$0xff]
    %v494 = vld [vmem:[#allocation3] sm:$0xff]
    %s495 = smul.u32 0, 4
    %s496 = smul.addr %s495, 8
    %s497 = scalar_lea.vmem [#allocation4], %s496
    %v498 = vld [vmem:[%s497] sm:$0xff]
    %v499 = vld [vmem:[%s497 + $0x8] sm:$0xff]
    %v500 = vld [vmem:[%s497 + $0x10] sm:$0xff]
    %v501 = vld [vmem:[%s497 + $0x18] sm:$0xff]
    %502 = vmatprep.subr.mxu0 %v430
    %503 = vmatpush1.msra.mxu0 %v429
    %504 = vmatprep.subr.mxu0 %v434
    %505 = vmatpush1.msra.mxu0 %v433
    %506 = vmatprep.subr.mxu0 %v438
    %507 = vmatpush1.msra.mxu0 %v437
    %508 = vmatprep.subr.mxu0 %v442
    %509 = vmatpush1.msra.mxu0 %v441
    %510 = vmatprep.subr.mxu0 %v446
    %511 = vmatpush1.msra.mxu0 %v445
    %512 = vmatprep.subr.mxu0 %v450
    %513 = vmatpush1.msra.mxu0 %v449
    %514 = vmatprep.subr.mxu0 %v454
    %515 = vmatpush1.msra.mxu0 %v453
    %516 = vmatprep.subr.mxu0 %v458
    %517 = vmatpush1.msra.mxu0 %v457
    %518 = vmatprep.subr.mxu0 %v462
    %519 = vmatpush1.msra.mxu0 %v461
    %520 = vmatprep.subr.mxu0 %v466
    %521 = vmatpush1.msra.mxu0 %v465
    %522 = vmatprep.subr.mxu0 %v470
    %523 = vmatpush1.msra.mxu0 %v469
    %524 = vmatprep.subr.mxu0 %v474
    %525 = vmatpush1.msra.mxu0 %v473
    %526 = vmatprep.subr.mxu0 %v478
    %527 = vmatpush1.msra.mxu0 %v477
    %528 = vmatprep.subr.mxu0 %v482
    %529 = vmatpush1.msra.mxu0 %v481
    %530 = vmatprep.subr.mxu0 %v486
    %531 = vmatpush1.msra.mxu0 %v485
    %532 = vmatprep.subr.mxu0 %v490
    %533 = vmatpush1.msra.mxu0 %v489
    %534 = vmatprep.subr.mxu0 0.0
    %535 = vmatpush1.msra.mxu0 0.0
    %536 = vmatprep.subr.mxu0 0.0
    %537 = vmatpush1.msra.mxu0 0.0
    %538 = vmatprep.subr.mxu0 0.0
    %539 = vmatpush1.msra.mxu0 0.0
    %540 = vmatprep.subr.mxu0 0.0
    %541 = vmatpush1.msra.mxu0 0.0
    %542 = vmatprep.subr.mxu0 0.0
    %543 = vmatpush1.msra.mxu0 0.0
    %544 = vmatprep.subr.mxu0 0.0
    %545 = vmatpush1.msra.mxu0 0.0
    %546 = vmatprep.subr.mxu0 0.0
    %547 = vmatpush1.msra.mxu0 0.0
    %548 = vmatprep.subr.mxu0 0.0
    %549 = vmatpush1.msra.mxu0 0.0
    %550 = vmatprep.subr.mxu0 0.0
    %551 = vmatpush1.msra.mxu0 0.0
    %552 = vmatprep.subr.mxu0 0.0
    %553 = vmatpush1.msra.mxu0 0.0
    %554 = vmatprep.subr.mxu0 0.0
    %555 = vmatpush1.msra.mxu0 0.0
    %556 = vmatprep.subr.mxu0 0.0
    %557 = vmatpush1.msra.mxu0 0.0
    %558 = vmatprep.subr.mxu0 0.0
    %559 = vmatpush1.msra.mxu0 0.0
    %560 = vmatprep.subr.mxu0 0.0
    %561 = vmatpush1.msra.mxu0 0.0
    %562 = vmatprep.subr.mxu0 0.0
    %563 = vmatpush1.msra.mxu0 0.0
    %564 = vmatprep.subr.mxu0 0.0
    %565 = vmatpush1.msra.mxu0 0.0
    %566 = vmatprep.mubr.f32.mxu0 0.0
    %567 = vmatmul.mubr.f32.gmra.mrb[0].mxu0 %v493
    %v568 = vpop.f32.mrb[0].mxu0
    %v569 = vadd.f32 0.0, %v568
    %v570 = vpop.f32.mrb[0].mxu0
    %v571 = vadd.f32 0.0, %v570
    %572 = vdwg.mxu0
    %573 = vmatprep.subr.mxu0 %v432
    %574 = vmatpush1.msra.mxu0 %v431
    %575 = vmatprep.subr.mxu0 %v436
    %576 = vmatpush1.msra.mxu0 %v435
    %577 = vmatprep.subr.mxu0 %v440
    %578 = vmatpush1.msra.mxu0 %v439
    %579 = vmatprep.subr.mxu0 %v444
    %580 = vmatpush1.msra.mxu0 %v443
    %581 = vmatprep.subr.mxu0 %v448
    %582 = vmatpush1.msra.mxu0 %v447
    %583 = vmatprep.subr.mxu0 %v452
    %584 = vmatpush1.msra.mxu0 %v451
    %585 = vmatprep.subr.mxu0 %v456
    %586 = vmatpush1.msra.mxu0 %v455
    %587 = vmatprep.subr.mxu0 %v460
    %588 = vmatpush1.msra.mxu0 %v459
    %589 = vmatprep.subr.mxu0 %v464
    %590 = vmatpush1.msra.mxu0 %v463
    %591 = vmatprep.subr.mxu0 %v468
    %592 = vmatpush1.msra.mxu0 %v467
    %593 = vmatprep.subr.mxu0 %v472
    %594 = vmatpush1.msra.mxu0 %v471
    %595 = vmatprep.subr.mxu0 %v476
    %596 = vmatpush1.msra.mxu0 %v475
    %597 = vmatprep.subr.mxu0 %v480
    %598 = vmatpush1.msra.mxu0 %v479
    %599 = vmatprep.subr.mxu0 %v484
    %600 = vmatpush1.msra.mxu0 %v483
    %601 = vmatprep.subr.mxu0 %v488
    %602 = vmatpush1.msra.mxu0 %v487
    %603 = vmatprep.subr.mxu0 %v492
    %604 = vmatpush1.msra.mxu0 %v491
    %605 = vmatprep.subr.mxu0 0.0
    %606 = vmatpush1.msra.mxu0 0.0
    %607 = vmatprep.subr.mxu0 0.0
    %608 = vmatpush1.msra.mxu0 0.0
    %609 = vmatprep.subr.mxu0 0.0
    %610 = vmatpush1.msra.mxu0 0.0
    %611 = vmatprep.subr.mxu0 0.0
    %612 = vmatpush1.msra.mxu0 0.0
    %613 = vmatprep.subr.mxu0 0.0
    %614 = vmatpush1.msra.mxu0 0.0
    %615 = vmatprep.subr.mxu0 0.0
    %616 = vmatpush1.msra.mxu0 0.0
    %617 = vmatprep.subr.mxu0 0.0
    %618 = vmatpush1.msra.mxu0 0.0
    %619 = vmatprep.subr.mxu0 0.0
    %620 = vmatpush1.msra.mxu0 0.0
    %621 = vmatprep.subr.mxu0 0.0
    %622 = vmatpush1.msra.mxu0 0.0
    %623 = vmatprep.subr.mxu0 0.0
    %624 = vmatpush1.msra.mxu0 0.0
    %625 = vmatprep.subr.mxu0 0.0
    %626 = vmatpush1.msra.mxu0 0.0
    %627 = vmatprep.subr.mxu0 0.0
    %628 = vmatpush1.msra.mxu0 0.0
    %629 = vmatprep.subr.mxu0 0.0
    %630 = vmatpush1.msra.mxu0 0.0
    %631 = vmatprep.subr.mxu0 0.0
    %632 = vmatpush1.msra.mxu0 0.0
    %633 = vmatprep.subr.mxu0 0.0
    %634 = vmatpush1.msra.mxu0 0.0
    %635 = vmatprep.subr.mxu0 0.0
    %636 = vmatpush1.msra.mxu0 0.0
    %637 = vmatprep.mubr.f32.mxu0 0.0
    %638 = vmatmul.mubr.f32.gmra.mrb[0].mxu0 %v493
    %v639 = vpop.f32.mrb[0].mxu0
    %v640 = vadd.f32 0.0, %v639
    %v641 = vpop.f32.mrb[0].mxu0
    %v642 = vadd.f32 0.0, %v641
    %643 = vdwg.mxu0
    %v644 = vadd.f32 %v498, %v569
    %v645 = vadd.f32 %v499, %v571
    %v646 = vadd.f32 %v500, %v640
    %v647 = vadd.f32 %v501, %v642
    %v648 = vxor.u32 %v644, 2147483648
    %v649 = vmul.f32 %v648, 1.442695
    %v650 = vpow.pop %v649
    %v651 = vadd.f32 %v650, 1.0
    %v652 = vrcp.pop %v651
    %v653 = vmul.f32 1.0, %v652
    %v654 = vxor.u32 %v645, 2147483648
    %v655 = vmul.f32 %v654, 1.442695
    %v656 = vpow.pop %v655
    %v657 = vadd.f32 %v656, 1.0
    %v658 = vrcp.pop %v657
    %v659 = vmul.f32 1.0, %v658
    %v660 = vtanh.pop %v646
    %v661 = vxor.u32 %v647, 2147483648
    %v662 = vmul.f32 %v661, 1.442695
    %v663 = vpow.pop %v662
    %v664 = vadd.f32 %v663, 1.0
    %v665 = vrcp.pop %v664
    %v666 = vmul.f32 1.0, %v665
    %v667 = vmul.f32 %v659, %v494
    %v668 = vmul.f32 %v653, %v660
    %v669 = vadd.f32 %v667, %v668
    %v670 = vtanh.pop %v669
    %v671 = vmul.f32 %v666, %v670
    %672 = vst [vmem:[#allocation13] sm:$0xff] %v671
    %s673 = smul.u32 1, 4
    %s674 = smul.addr %s673, 8
    %s675 = scalar_lea.vmem [#allocation4], %s674
    %v676 = vld [vmem:[%s675] sm:$0xff]
    %v677 = vld [vmem:[%s675 + $0x8] sm:$0xff]
    %v678 = vld [vmem:[%s675 + $0x10] sm:$0xff]
    %v679 = vld [vmem:[%s675 + $0x18] sm:$0xff]
    %680 = vmatprep.subr.mxu0 %v430
    %681 = vmatpush1.msra.mxu0 %v429
    %682 = vmatprep.subr.mxu0 %v434
    %683 = vmatpush1.msra.mxu0 %v433
    %684 = vmatprep.subr.mxu0 %v438
    %685 = vmatpush1.msra.mxu0 %v437
    %686 = vmatprep.subr.mxu0 %v442
    %687 = vmatpush1.msra.mxu0 %v441
    %688 = vmatprep.subr.mxu0 %v446
    %689 = vmatpush1.msra.mxu0 %v445
    %690 = vmatprep.subr.mxu0 %v450
    %691 = vmatpush1.msra.mxu0 %v449
    %692 = vmatprep.subr.mxu0 %v454
    %693 = vmatpush1.msra.mxu0 %v453
    %694 = vmatprep.subr.mxu0 %v458
    %695 = vmatpush1.msra.mxu0 %v457
    %696 = vmatprep.subr.mxu0 %v462
    %697 = vmatpush1.msra.mxu0 %v461
    %698 = vmatprep.subr.mxu0 %v466
    %699 = vmatpush1.msra.mxu0 %v465
    %700 = vmatprep.subr.mxu0 %v470
    %701 = vmatpush1.msra.mxu0 %v469
    %702 = vmatprep.subr.mxu0 %v474
    %703 = vmatpush1.msra.mxu0 %v473
    %704 = vmatprep.subr.mxu0 %v478
    %705 = vmatpush1.msra.mxu0 %v477
    %706 = vmatprep.subr.mxu0 %v482
    %707 = vmatpush1.msra.mxu0 %v481
    %708 = vmatprep.subr.mxu0 %v486
    %709 = vmatpush1.msra.mxu0 %v485
    %710 = vmatprep.subr.mxu0 %v490
    %711 = vmatpush1.msra.mxu0 %v489
    %712 = vmatprep.subr.mxu0 0.0
    %713 = vmatpush1.msra.mxu0 0.0
    %714 = vmatprep.subr.mxu0 0.0
    %715 = vmatpush1.msra.mxu0 0.0
    %716 = vmatprep.subr.mxu0 0.0
    %717 = vmatpush1.msra.mxu0 0.0
    %718 = vmatprep.subr.mxu0 0.0
    %719 = vmatpush1.msra.mxu0 0.0
    %720 = vmatprep.subr.mxu0 0.0
    %721 = vmatpush1.msra.mxu0 0.0
    %722 = vmatprep.subr.mxu0 0.0
    %723 = vmatpush1.msra.mxu0 0.0
    %724 = vmatprep.subr.mxu0 0.0
    %725 = vmatpush1.msra.mxu0 0.0
    %726 = vmatprep.subr.mxu0 0.0
    %727 = vmatpush1.msra.mxu0 0.0
    %728 = vmatprep.subr.mxu0 0.0
    %729 = vmatpush1.msra.mxu0 0.0
    %730 = vmatprep.subr.mxu0 0.0
    %731 = vmatpush1.msra.mxu0 0.0
    %732 = vmatprep.subr.mxu0 0.0
    %733 = vmatpush1.msra.mxu0 0.0
    %734 = vmatprep.subr.mxu0 0.0
    %735 = vmatpush1.msra.mxu0 0.0
    %736 = vmatprep.subr.mxu0 0.0
    %737 = vmatpush1.msra.mxu0 0.0
    %738 = vmatprep.subr.mxu0 0.0
    %739 = vmatpush1.msra.mxu0 0.0
    %740 = vmatprep.subr.mxu0 0.0
    %741 = vmatpush1.msra.mxu0 0.0
    %742 = vmatprep.subr.mxu0 0.0
    %743 = vmatpush1.msra.mxu0 0.0
    %744 = vmatprep.mubr.f32.mxu0 0.0
    %745 = vmatmul.mubr.f32.gmra.mrb[0].mxu0 %v671
    %v746 = vpop.f32.mrb[0].mxu0
    %v747 = vadd.f32 0.0, %v746
    %v748 = vpop.f32.mrb[0].mxu0
    %v749 = vadd.f32 0.0, %v748
    %750 = vdwg.mxu0
    %751 = vmatprep.subr.mxu0 %v432
    %752 = vmatpush1.msra.mxu0 %v431
    %753 = vmatprep.subr.mxu0 %v436
    %754 = vmatpush1.msra.mxu0 %v435
    %755 = vmatprep.subr.mxu0 %v440
    %756 = vmatpush1.msra.mxu0 %v439
    %757 = vmatprep.subr.mxu0 %v444
    %758 = vmatpush1.msra.mxu0 %v443
    %759 = vmatprep.subr.mxu0 %v448
    %760 = vmatpush1.msra.mxu0 %v447
    %761 = vmatprep.subr.mxu0 %v452
    %762 = vmatpush1.msra.mxu0 %v451
    %763 = vmatprep.subr.mxu0 %v456
    %764 = vmatpush1.msra.mxu0 %v455
    %765 = vmatprep.subr.mxu0 %v460
    %766 = vmatpush1.msra.mxu0 %v459
    %767 = vmatprep.subr.mxu0 %v464
    %768 = vmatpush1.msra.mxu0 %v463
    %769 = vmatprep.subr.mxu0 %v468
    %770 = vmatpush1.msra.mxu0 %v467
    %771 = vmatprep.subr.mxu0 %v472
    %772 = vmatpush1.msra.mxu0 %v471
    %773 = vmatprep.subr.mxu0 %v476
    %774 = vmatpush1.msra.mxu0 %v475
    %775 = vmatprep.subr.mxu0 %v480
    %776 = vmatpush1.msra.mxu0 %v479
    %777 = vmatprep.subr.mxu0 %v484
    %778 = vmatpush1.msra.mxu0 %v483
    %779 = vmatprep.subr.mxu0 %v488
    %780 = vmatpush1.msra.mxu0 %v487
    %781 = vmatprep.subr.mxu0 %v492
    %782 = vmatpush1.msra.mxu0 %v491
    %783 = vmatprep.subr.mxu0 0.0
    %784 = vmatpush1.msra.mxu0 0.0
    %785 = vmatprep.subr.mxu0 0.0
    %786 = vmatpush1.msra.mxu0 0.0
    %787 = vmatprep.subr.mxu0 0.0
    %788 = vmatpush1.msra.mxu0 0.0
    %789 = vmatprep.subr.mxu0 0.0
    %790 = vmatpush1.msra.mxu0 0.0
    %791 = vmatprep.subr.mxu0 0.0
    %792 = vmatpush1.msra.mxu0 0.0
    %793 = vmatprep.subr.mxu0 0.0
    %794 = vmatpush1.msra.mxu0 0.0
    %795 = vmatprep.subr.mxu0 0.0
    %796 = vmatpush1.msra.mxu0 0.0
    %797 = vmatprep.subr.mxu0 0.0
    %798 = vmatpush1.msra.mxu0 0.0
    %799 = vmatprep.subr.mxu0 0.0
    %800 = vmatpush1.msra.mxu0 0.0
    %801 = vmatprep.subr.mxu0 0.0
    %802 = vmatpush1.msra.mxu0 0.0
    %803 = vmatprep.subr.mxu0 0.0
    %804 = vmatpush1.msra.mxu0 0.0
    %805 = vmatprep.subr.mxu0 0.0
    %806 = vmatpush1.msra.mxu0 0.0
    %807 = vmatprep.subr.mxu0 0.0
    %808 = vmatpush1.msra.mxu0 0.0
    %809 = vmatprep.subr.mxu0 0.0
    %810 = vmatpush1.msra.mxu0 0.0
    %811 = vmatprep.subr.mxu0 0.0
    %812 = vmatpush1.msra.mxu0 0.0
    %813 = vmatprep.subr.mxu0 0.0
    %814 = vmatpush1.msra.mxu0 0.0
    %815 = vmatprep.mubr.f32.mxu0 0.0
    %816 = vmatmul.mubr.f32.gmra.mrb[0].mxu0 %v671
    %v817 = vpop.f32.mrb[0].mxu0
    %v818 = vadd.f32 0.0, %v817
    %v819 = vpop.f32.mrb[0].mxu0
    %v820 = vadd.f32 0.0, %v819
    %821 = vdwg.mxu0
    %v822 = vadd.f32 %v676, %v747
    %v823 = vadd.f32 %v677, %v749
    %v824 = vadd.f32 %v678, %v818
    %v825 = vadd.f32 %v679, %v820
    %v826 = vxor.u32 %v822, 2147483648
    %v827 = vmul.f32 %v826, 1.442695
    %v828 = vpow.pop %v827
    %v829 = vadd.f32 %v828, 1.0
    %v830 = vrcp.pop %v829
    %v831 = vmul.f32 1.0, %v830
    %v832 = vxor.u32 %v823, 2147483648
    %v833 = vmul.f32 %v832, 1.442695
    %v834 = vpow.pop %v833
    %v835 = vadd.f32 %v834, 1.0
    %v836 = vrcp.pop %v835
    %v837 = vmul.f32 1.0, %v836
    %v838 = vtanh.pop %v824
    %v839 = vxor.u32 %v825, 2147483648
    %v840 = vmul.f32 %v839, 1.442695
    %v841 = vpow.pop %v840
    %v842 = vadd.f32 %v841, 1.0
    %v843 = vrcp.pop %v842
    %v844 = vmul.f32 1.0, %v843
    %v845 = vmul.f32 %v837, %v669
    %v846 = vmul.f32 %v831, %v838
    %v847 = vadd.f32 %v845, %v846
    %v848 = vtanh.pop %v847
    %v849 = vmul.f32 %v844, %v848
    %s850 = scalar_lea.vmem [#allocation13], 8
    %851 = vst [vmem:[%s850] sm:$0xff] %v849
    %s852 = smul.u32 2, 4
    %s853 = smul.addr %s852, 8
    %s854 = scalar_lea.vmem [#allocation4], %s853
    %v855 = vld [vmem:[%s854] sm:$0xff]
    %v856 = vld [vmem:[%s854 + $0x8] sm:$0xff]
    %v857 = vld [vmem:[%s854 + $0x10] sm:$0xff]
    %v858 = vld [vmem:[%s854 + $0x18] sm:$0xff]
    %859 = vmatprep.subr.mxu0 %v430
    %860 = vmatpush1.msra.mxu0 %v429
    %861 = vmatprep.subr.mxu0 %v434
    %862 = vmatpush1.msra.mxu0 %v433
    %863 = vmatprep.subr.mxu0 %v438
    %864 = vmatpush1.msra.mxu0 %v437
    %865 = vmatprep.subr.mxu0 %v442
    %866 = vmatpush1.msra.mxu0 %v441
    %867 = vmatprep.subr.mxu0 %v446
    %868 = vmatpush1.msra.mxu0 %v445
    %869 = vmatprep.subr.mxu0 %v450
    %870 = vmatpush1.msra.mxu0 %v449
    %871 = vmatprep.subr.mxu0 %v454
    %872 = vmatpush1.msra.mxu0 %v453
    %873 = vmatprep.subr.mxu0 %v458
    %874 = vmatpush1.msra.mxu0 %v457
    %875 = vmatprep.subr.mxu0 %v462
    %876 = vmatpush1.msra.mxu0 %v461
    %877 = vmatprep.subr.mxu0 %v466
    %878 = vmatpush1.msra.mxu0 %v465
    %879 = vmatprep.subr.mxu0 %v470
    %880 = vmatpush1.msra.mxu0 %v469
    %881 = vmatprep.subr.mxu0 %v474
    %882 = vmatpush1.msra.mxu0 %v473
    %883 = vmatprep.subr.mxu0 %v478
    %884 = vmatpush1.msra.mxu0 %v477
    %885 = vmatprep.subr.mxu0 %v482
    %886 = vmatpush1.msra.mxu0 %v481
    %887 = vmatprep.subr.mxu0 %v486
    %888 = vmatpush1.msra.mxu0 %v485
    %889 = vmatprep.subr.mxu0 %v490
    %890 = vmatpush1.msra.mxu0 %v489
    %891 = vmatprep.subr.mxu0 0.0
    %892 = vmatpush1.msra.mxu0 0.0
    %893 = vmatprep.subr.mxu0 0.0
    %894 = vmatpush1.msra.mxu0 0.0
    %895 = vmatprep.subr.mxu0 0.0
    %896 = vmatpush1.msra.mxu0 0.0
    %897 = vmatprep.subr.mxu0 0.0
    %898 = vmatpush1.msra.mxu0 0.0
    %899 = vmatprep.subr.mxu0 0.0
    %900 = vmatpush1.msra.mxu0 0.0
    %901 = vmatprep.subr.mxu0 0.0
    %902 = vmatpush1.msra.mxu0 0.0
    %903 = vmatprep.subr.mxu0 0.0
    %904 = vmatpush1.msra.mxu0 0.0
    %905 = vmatprep.subr.mxu0 0.0
    %906 = vmatpush1.msra.mxu0 0.0
    %907 = vmatprep.subr.mxu0 0.0
    %908 = vmatpush1.msra.mxu0 0.0
    %909 = vmatprep.subr.mxu0 0.0
    %910 = vmatpush1.msra.mxu0 0.0
    %911 = vmatprep.subr.mxu0 0.0
    %912 = vmatpush1.msra.mxu0 0.0
    %913 = vmatprep.subr.mxu0 0.0
    %914 = vmatpush1.msra.mxu0 0.0
    %915 = vmatprep.subr.mxu0 0.0
    %916 = vmatpush1.msra.mxu0 0.0
    %917 = vmatprep.subr.mxu0 0.0
    %918 = vmatpush1.msra.mxu0 0.0
    %919 = vmatprep.subr.mxu0 0.0
    %920 = vmatpush1.msra.mxu0 0.0
    %921 = vmatprep.subr.mxu0 0.0
    %922 = vmatpush1.msra.mxu0 0.0
    %923 = vmatprep.mubr.f32.mxu0 0.0
    %924 = vmatmul.mubr.f32.gmra.mrb[0].mxu0 %v849
    %v925 = vpop.f32.mrb[0].mxu0
    %v926 = vadd.f32 0.0, %v925
    %v927 = vpop.f32.mrb[0].mxu0
    %v928 = vadd.f32 0.0, %v927
    %929 = vdwg.mxu0
    %930 = vmatprep.subr.mxu0 %v432
    %931 = vmatpush1.msra.mxu0 %v431
    %932 = vmatprep.subr.mxu0 %v436
    %933 = vmatpush1.msra.mxu0 %v435
    %934 = vmatprep.subr.mxu0 %v440
    %935 = vmatpush1.msra.mxu0 %v439
    %936 = vmatprep.subr.mxu0 %v444
    %937 = vmatpush1.msra.mxu0 %v443
    %938 = vmatprep.subr.mxu0 %v448
    %939 = vmatpush1.msra.mxu0 %v447
    %940 = vmatprep.subr.mxu0 %v452
    %941 = vmatpush1.msra.mxu0 %v451
    %942 = vmatprep.subr.mxu0 %v456
    %943 = vmatpush1.msra.mxu0 %v455
    %944 = vmatprep.subr.mxu0 %v460
    %945 = vmatpush1.msra.mxu0 %v459
    %946 = vmatprep.subr.mxu0 %v464
    %947 = vmatpush1.msra.mxu0 %v463
    %948 = vmatprep.subr.mxu0 %v468
    %949 = vmatpush1.msra.mxu0 %v467
    %950 = vmatprep.subr.mxu0 %v472
    %951 = vmatpush1.msra.mxu0 %v471
    %952 = vmatprep.subr.mxu0 %v476
    %953 = vmatpush1.msra.mxu0 %v475
    %954 = vmatprep.subr.mxu0 %v480
    %955 = vmatpush1.msra.mxu0 %v479
    %956 = vmatprep.subr.mxu0 %v484
    %957 = vmatpush1.msra.mxu0 %v483
    %958 = vmatprep.subr.mxu0 %v488
    %959 = vmatpush1.msra.mxu0 %v487
    %960 = vmatprep.subr.mxu0 %v492
    %961 = vmatpush1.msra.mxu0 %v491
    %962 = vmatprep.subr.mxu0 0.0
    %963 = vmatpush1.msra.mxu0 0.0
    %964 = vmatprep.subr.mxu0 0.0
    %965 = vmatpush1.msra.mxu0 0.0
    %966 = vmatprep.subr.mxu0 0.0
    %967 = vmatpush1.msra.mxu0 0.0
    %968 = vmatprep.subr.mxu0 0.0
    %969 = vmatpush1.msra.mxu0 0.0
    %970 = vmatprep.subr.mxu0 0.0
    %971 = vmatpush1.msra.mxu0 0.0
    %972 = vmatprep.subr.mxu0 0.0
    %973 = vmatpush1.msra.mxu0 0.0
    %974 = vmatprep.subr.mxu0 0.0
    %975 = vmatpush1.msra.mxu0 0.0
    %976 = vmatprep.subr.mxu0 0.0
    %977 = vmatpush1.msra.mxu0 0.0
    %978 = vmatprep.subr.mxu0 0.0
    %979 = vmatpush1.msra.mxu0 0.0
    %980 = vmatprep.subr.mxu0 0.0
    %981 = vmatpush1.msra.mxu0 0.0
    %982 = vmatprep.subr.mxu0 0.0
    %983 = vmatpush1.msra.mxu0 0.0
    %984 = vmatprep.subr.mxu0 0.0
    %985 = vmatpush1.msra.mxu0 0.0
    %986 = vmatprep.subr.mxu0 0.0
    %987 = vmatpush1.msra.mxu0 0.0
    %988 = vmatprep.subr.mxu0 0.0
    %989 = vmatpush1.msra.mxu0 0.0
    %990 = vmatprep.subr.mxu0 0.0
    %991 = vmatpush1.msra.mxu0 0.0
    %992 = vmatprep.subr.mxu0 0.0
    %993 = vmatpush1.msra.mxu0 0.0
    %994 = vmatprep.mubr.f32.mxu0 0.0
    %995 = vmatmul.mubr.f32.gmra.mrb[0].mxu0 %v849
    %v996 = vpop.f32.mrb[0].mxu0
    %v997 = vadd.f32 0.0, %v996
    %v998 = vpop.f32.mrb[0].mxu0
    %v999 = vadd.f32 0.0, %v998
    %1000 = vdwg.mxu0
    %v1001 = vadd.f32 %v855, %v926
    %v1002 = vadd.f32 %v856, %v928
    %v1003 = vadd.f32 %v857, %v997
    %v1004 = vadd.f32 %v858, %v999
    %v1005 = vxor.u32 %v1001, 2147483648
    %v1006 = vmul.f32 %v1005, 1.442695
    %v1007 = vpow.pop %v1006
    %v1008 = vadd.f32 %v1007, 1.0
    %v1009 = vrcp.pop %v1008
    %v1010 = vmul.f32 1.0, %v1009
    %v1011 = vxor.u32 %v1002, 2147483648
    %v1012 = vmul.f32 %v1011, 1.442695
    %v1013 = vpow.pop %v1012
    %v1014 = vadd.f32 %v1013, 1.0
    %v1015 = vrcp.pop %v1014
    %v1016 = vmul.f32 1.0, %v1015
    %v1017 = vtanh.pop %v1003
    %v1018 = vxor.u32 %v1004, 2147483648
    %v1019 = vmul.f32 %v1018, 1.442695
    %v1020 = vpow.pop %v1019
    %v1021 = vadd.f32 %v1020, 1.0
    %v1022 = vrcp.pop %v1021
    %v1023 = vmul.f32 1.0, %v1022
    %v1024 = vmul.f32 %v1016, %v847
    %v1025 = vmul.f32 %v1010, %v1017
    %v1026 = vadd.f32 %v1024, %v1025
    %v1027 = vtanh.pop %v1026
    %v1028 = vmul.f32 %v1023, %v1027
    %s1029 = scalar_lea.vmem [#allocation13], 16
    %1030 = vst [vmem:[%s1029] sm:$0xff] %v1028
    %s1031 = smul.u32 3, 4
    %s1032 = smul.addr %s1031, 8
    %s1033 = scalar_lea.vmem [#allocation4], %s1032
    %v1034 = vld [vmem:[%s1033] sm:$0xff]
    %v1035 = vld [vmem:[%s1033 + $0x8] sm:$0xff]
    %v1036 = vld [vmem:[%s1033 + $0x10] sm:$0xff]
    %v1037 = vld [vmem:[%s1033 + $0x18] sm:$0xff]
    %1038 = vmatprep.subr.mxu0 %v430
    %1039 = vmatpush1.msra.mxu0 %v429
    %1040 = vmatprep.subr.mxu0 %v434
    %1041 = vmatpush1.msra.mxu0 %v433
    %1042 = vmatprep.subr.mxu0 %v438
    %1043 = vmatpush1.msra.mxu0 %v437
    %1044 = vmatprep.subr.mxu0 %v442
    %1045 = vmatpush1.msra.mxu0 %v441
    %1046 = vmatprep.subr.mxu0 %v446
    %1047 = vmatpush1.msra.mxu0 %v445
    %1048 = vmatprep.subr.mxu0 %v450
    %1049 = vmatpush1.msra.mxu0 %v449
    %1050 = vmatprep.subr.mxu0 %v454
    %1051 = vmatpush1.msra.mxu0 %v453
    %1052 = vmatprep.subr.mxu0 %v458
    %1053 = vmatpush1.msra.mxu0 %v457
    %1054 = vmatprep.subr.mxu0 %v462
    %1055 = vmatpush1.msra.mxu0 %v461
    %1056 = vmatprep.subr.mxu0 %v466
    %1057 = vmatpush1.msra.mxu0 %v465
    %1058 = vmatprep.subr.mxu0 %v470
    %1059 = vmatpush1.msra.mxu0 %v469
    %1060 = vmatprep.subr.mxu0 %v474
    %1061 = vmatpush1.msra.mxu0 %v473
    %1062 = vmatprep.subr.mxu0 %v478
    %1063 = vmatpush1.msra.mxu0 %v477
    %1064 = vmatprep.subr.mxu0 %v482
    %1065 = vmatpush1.msra.mxu0 %v481
    %1066 = vmatprep.subr.mxu0 %v486
    %1067 = vmatpush1.msra.mxu0 %v485
    %1068 = vmatprep.subr.mxu0 %v490
    %1069 = vmatpush1.msra.mxu0 %v489
    %1070 = vmatprep.subr.mxu0 0.0
    %1071 = vmatpush1.msra.mxu0 0.0
    %1072 = vmatprep.subr.mxu0 0.0
    %1073 = vmatpush1.msra.mxu0 0.0
    %1074 = vmatprep.subr.mxu0 0.0
    %1075 = vmatpush1.msra.mxu0 0.0
    %1076 = vmatprep.subr.mxu0 0.0
    %1077 = vmatpush1.msra.mxu0 0.0
    %1078 = vmatprep.subr.mxu0 0.0
    %1079 = vmatpush1.msra.mxu0 0.0
    %1080 = vmatprep.subr.mxu0 0.0
    %1081 = vmatpush1.msra.mxu0 0.0
    %1082 = vmatprep.subr.mxu0 0.0
    %1083 = vmatpush1.msra.mxu0 0.0
    %1084 = vmatprep.subr.mxu0 0.0
    %1085 = vmatpush1.msra.mxu0 0.0
    %1086 = vmatprep.subr.mxu0 0.0
    %1087 = vmatpush1.msra.mxu0 0.0
    %1088 = vmatprep.subr.mxu0 0.0
    %1089 = vmatpush1.msra.mxu0 0.0
    %1090 = vmatprep.subr.mxu0 0.0
    %1091 = vmatpush1.msra.mxu0 0.0
    %1092 = vmatprep.subr.mxu0 0.0
    %1093 = vmatpush1.msra.mxu0 0.0
    %1094 = vmatprep.subr.mxu0 0.0
    %1095 = vmatpush1.msra.mxu0 0.0
    %1096 = vmatprep.subr.mxu0 0.0
    %1097 = vmatpush1.msra.mxu0 0.0
    %1098 = vmatprep.subr.mxu0 0.0
    %1099 = vmatpush1.msra.mxu0 0.0
    %1100 = vmatprep.subr.mxu0 0.0
    %1101 = vmatpush1.msra.mxu0 0.0
    %1102 = vmatprep.mubr.f32.mxu0 0.0
    %1103 = vmatmul.mubr.f32.gmra.mrb[0].mxu0 %v1028
    %v1104 = vpop.f32.mrb[0].mxu0
    %v1105 = vadd.f32 0.0, %v1104
    %v1106 = vpop.f32.mrb[0].mxu0
    %v1107 = vadd.f32 0.0, %v1106
    %1108 = vdwg.mxu0
    %1109 = vmatprep.subr.mxu0 %v432
    %1110 = vmatpush1.msra.mxu0 %v431
    %1111 = vmatprep.subr.mxu0 %v436
    %1112 = vmatpush1.msra.mxu0 %v435
    %1113 = vmatprep.subr.mxu0 %v440
    %1114 = vmatpush1.msra.mxu0 %v439
    %1115 = vmatprep.subr.mxu0 %v444
    %1116 = vmatpush1.msra.mxu0 %v443
    %1117 = vmatprep.subr.mxu0 %v448
    %1118 = vmatpush1.msra.mxu0 %v447
    %1119 = vmatprep.subr.mxu0 %v452
    %1120 = vmatpush1.msra.mxu0 %v451
    %1121 = vmatprep.subr.mxu0 %v456
    %1122 = vmatpush1.msra.mxu0 %v455
    %1123 = vmatprep.subr.mxu0 %v460
    %1124 = vmatpush1.msra.mxu0 %v459
    %1125 = vmatprep.subr.mxu0 %v464
    %1126 = vmatpush1.msra.mxu0 %v463
    %1127 = vmatprep.subr.mxu0 %v468
    %1128 = vmatpush1.msra.mxu0 %v467
    %1129 = vmatprep.subr.mxu0 %v472
    %1130 = vmatpush1.msra.mxu0 %v471
    %1131 = vmatprep.subr.mxu0 %v476
    %1132 = vmatpush1.msra.mxu0 %v475
    %1133 = vmatprep.subr.mxu0 %v480
    %1134 = vmatpush1.msra.mxu0 %v479
    %1135 = vmatprep.subr.mxu0 %v484
    %1136 = vmatpush1.msra.mxu0 %v483
    %1137 = vmatprep.subr.mxu0 %v488
    %1138 = vmatpush1.msra.mxu0 %v487
    %1139 = vmatprep.subr.mxu0 %v492
    %1140 = vmatpush1.msra.mxu0 %v491
    %1141 = vmatprep.subr.mxu0 0.0
    %1142 = vmatpush1.msra.mxu0 0.0
    %1143 = vmatprep.subr.mxu0 0.0
    %1144 = vmatpush1.msra.mxu0 0.0
    %1145 = vmatprep.subr.mxu0 0.0
    %1146 = vmatpush1.msra.mxu0 0.0
    %1147 = vmatprep.subr.mxu0 0.0
    %1148 = vmatpush1.msra.mxu0 0.0
    %1149 = vmatprep.subr.mxu0 0.0
    %1150 = vmatpush1.msra.mxu0 0.0
    %1151 = vmatprep.subr.mxu0 0.0
    %1152 = vmatpush1.msra.mxu0 0.0
    %1153 = vmatprep.subr.mxu0 0.0
    %1154 = vmatpush1.msra.mxu0 0.0
    %1155 = vmatprep.subr.mxu0 0.0
    %1156 = vmatpush1.msra.mxu0 0.0
    %1157 = vmatprep.subr.mxu0 0.0
    %1158 = vmatpush1.msra.mxu0 0.0
    %1159 = vmatprep.subr.mxu0 0.0
    %1160 = vmatpush1.msra.mxu0 0.0
    %1161 = vmatprep.subr.mxu0 0.0
    %1162 = vmatpush1.msra.mxu0 0.0
    %1163 = vmatprep.subr.mxu0 0.0
    %1164 = vmatpush1.msra.mxu0 0.0
    %1165 = vmatprep.subr.mxu0 0.0
    %1166 = vmatpush1.msra.mxu0 0.0
    %1167 = vmatprep.subr.mxu0 0.0
    %1168 = vmatpush1.msra.mxu0 0.0
    %1169 = vmatprep.subr.mxu0 0.0
    %1170 = vmatpush1.msra.mxu0 0.0
    %1171 = vmatprep.subr.mxu0 0.0
    %1172 = vmatpush1.msra.mxu0 0.0
    %1173 = vmatprep.mubr.f32.mxu0 0.0
    %1174 = vmatmul.mubr.f32.gmra.mrb[0].mxu0 %v1028
    %v1175 = vpop.f32.mrb[0].mxu0
    %v1176 = vadd.f32 0.0, %v1175
    %v1177 = vpop.f32.mrb[0].mxu0
    %v1178 = vadd.f32 0.0, %v1177
    %1179 = vdwg.mxu0
    %v1180 = vadd.f32 %v1034, %v1105
    %v1181 = vadd.f32 %v1035, %v1107
    %v1182 = vadd.f32 %v1036, %v1176
    %v1183 = vadd.f32 %v1037, %v1178
    %v1184 = vxor.u32 %v1180, 2147483648
    %v1185 = vmul.f32 %v1184, 1.442695
    %v1186 = vpow.pop %v1185
    %v1187 = vadd.f32 %v1186, 1.0
    %v1188 = vrcp.pop %v1187
    %v1189 = vmul.f32 1.0, %v1188
    %v1190 = vxor.u32 %v1181, 2147483648
    %v1191 = vmul.f32 %v1190, 1.442695
    %v1192 = vpow.pop %v1191
    %v1193 = vadd.f32 %v1192, 1.0
    %v1194 = vrcp.pop %v1193
    %v1195 = vmul.f32 1.0, %v1194
    %v1196 = vtanh.pop %v1182
    %v1197 = vxor.u32 %v1183, 2147483648
    %v1198 = vmul.f32 %v1197, 1.442695
    %v1199 = vpow.pop %v1198
    %v1200 = vadd.f32 %v1199, 1.0
    %v1201 = vrcp.pop %v1200
    %v1202 = vmul.f32 1.0, %v1201
    %v1203 = vmul.f32 %v1195, %v1026
    %v1204 = vmul.f32 %v1189, %v1196
    %v1205 = vadd.f32 %v1203, %v1204
    %v1206 = vtanh.pop %v1205
    %v1207 = vmul.f32 %v1202, %v1206
    %s1208 = scalar_lea.vmem [#allocation13], 24
    %1209 = vst [vmem:[%s1208] sm:$0xff] %v1207
    %s1210 = smul.u32 4, 4
    %s1211 = smul.addr %s1210, 8
    %s1212 = scalar_lea.vmem [#allocation4], %s1211
    %v1213 = vld [vmem:[%s1212] sm:$0xff]
    %v1214 = vld [vmem:[%s1212 + $0x8] sm:$0xff]
    %v1215 = vld [vmem:[%s1212 + $0x10] sm:$0xff]
    %v1216 = vld [vmem:[%s1212 + $0x18] sm:$0xff]
    %1217 = vmatprep.subr.mxu0 %v430
    %1218 = vmatpush1.msra.mxu0 %v429
    %1219 = vmatprep.subr.mxu0 %v434
    %1220 = vmatpush1.msra.mxu0 %v433
    %1221 = vmatprep.subr.mxu0 %v438
    %1222 = vmatpush1.msra.mxu0 %v437
    %1223 = vmatprep.subr.mxu0 %v442
    %1224 = vmatpush1.msra.mxu0 %v441
    %1225 = vmatprep.subr.mxu0 %v446
    %1226 = vmatpush1.msra.mxu0 %v445
    %1227 = vmatprep.subr.mxu0 %v450
    %1228 = vmatpush1.msra.mxu0 %v449
    %1229 = vmatprep.subr.mxu0 %v454
    %1230 = vmatpush1.msra.mxu0 %v453
    %1231 = vmatprep.subr.mxu0 %v458
    %1232 = vmatpush1.msra.mxu0 %v457
    %1233 = vmatprep.subr.mxu0 %v462
    %1234 = vmatpush1.msra.mxu0 %v461
    %1235 = vmatprep.subr.mxu0 %v466
    %1236 = vmatpush1.msra.mxu0 %v465
    %1237 = vmatprep.subr.mxu0 %v470
    %1238 = vmatpush1.msra.mxu0 %v469
    %1239 = vmatprep.subr.mxu0 %v474
    %1240 = vmatpush1.msra.mxu0 %v473
    %1241 = vmatprep.subr.mxu0 %v478
    %1242 = vmatpush1.msra.mxu0 %v477
    %1243 = vmatprep.subr.mxu0 %v482
    %1244 = vmatpush1.msra.mxu0 %v481
    %1245 = vmatprep.subr.mxu0 %v486
    %1246 = vmatpush1.msra.mxu0 %v485
    %1247 = vmatprep.subr.mxu0 %v490
    %1248 = vmatpush1.msra.mxu0 %v489
    %1249 = vmatprep.subr.mxu0 0.0
    %1250 = vmatpush1.msra.mxu0 0.0
    %1251 = vmatprep.subr.mxu0 0.0
    %1252 = vmatpush1.msra.mxu0 0.0
    %1253 = vmatprep.subr.mxu0 0.0
    %1254 = vmatpush1.msra.mxu0 0.0
    %1255 = vmatprep.subr.mxu0 0.0
    %1256 = vmatpush1.msra.mxu0 0.0
    %1257 = vmatprep.subr.mxu0 0.0
    %1258 = vmatpush1.msra.mxu0 0.0
    %1259 = vmatprep.subr.mxu0 0.0
    %1260 = vmatpush1.msra.mxu0 0.0
    %1261 = vmatprep.subr.mxu0 0.0
    %1262 = vmatpush1.msra.mxu0 0.0
    %1263 = vmatprep.subr.mxu0 0.0
    %1264 = vmatpush1.msra.mxu0 0.0
    %1265 = vmatprep.subr.mxu0 0.0
    %1266 = vmatpush1.msra.mxu0 0.0
    %1267 = vmatprep.subr.mxu0 0.0
    %1268 = vmatpush1.msra.mxu0 0.0
    %1269 = vmatprep.subr.mxu0 0.0
    %1270 = vmatpush1.msra.mxu0 0.0
    %1271 = vmatprep.subr.mxu0 0.0
    %1272 = vmatpush1.msra.mxu0 0.0
    %1273 = vmatprep.subr.mxu0 0.0
    %1274 = vmatpush1.msra.mxu0 0.0
    %1275 = vmatprep.subr.mxu0 0.0
    %1276 = vmatpush1.msra.mxu0 0.0
    %1277 = vmatprep.subr.mxu0 0.0
    %1278 = vmatpush1.msra.mxu0 0.0
    %1279 = vmatprep.subr.mxu0 0.0
    %1280 = vmatpush1.msra.mxu0 0.0
    %1281 = vmatprep.mubr.f32.mxu0 0.0
    %1282 = vmatmul.mubr.f32.gmra.mrb[0].mxu0 %v1207
    %v1283 = vpop.f32.mrb[0].mxu0
    %v1284 = vadd.f32 0.0, %v1283
    %v1285 = vpop.f32.mrb[0].mxu0
    %v1286 = vadd.f32 0.0, %v1285
    %1287 = vdwg.mxu0
    %1288 = vmatprep.subr.mxu0 %v432
    %1289 = vmatpush1.msra.mxu0 %v431
    %1290 = vmatprep.subr.mxu0 %v436
    %1291 = vmatpush1.msra.mxu0 %v435
    %1292 = vmatprep.subr.mxu0 %v440
    %1293 = vmatpush1.msra.mxu0 %v439
    %1294 = vmatprep.subr.mxu0 %v444
    %1295 = vmatpush1.msra.mxu0 %v443
    %1296 = vmatprep.subr.mxu0 %v448
    %1297 = vmatpush1.msra.mxu0 %v447
    %1298 = vmatprep.subr.mxu0 %v452
    %1299 = vmatpush1.msra.mxu0 %v451
    %1300 = vmatprep.subr.mxu0 %v456
    %1301 = vmatpush1.msra.mxu0 %v455
    %1302 = vmatprep.subr.mxu0 %v460
    %1303 = vmatpush1.msra.mxu0 %v459
    %1304 = vmatprep.subr.mxu0 %v464
    %1305 = vmatpush1.msra.mxu0 %v463
    %1306 = vmatprep.subr.mxu0 %v468
    %1307 = vmatpush1.msra.mxu0 %v467
    %1308 = vmatprep.subr.mxu0 %v472
    %1309 = vmatpush1.msra.mxu0 %v471
    %1310 = vmatprep.subr.mxu0 %v476
    %1311 = vmatpush1.msra.mxu0 %v475
    %1312 = vmatprep.subr.mxu0 %v480
    %1313 = vmatpush1.msra.mxu0 %v479
    %1314 = vmatprep.subr.mxu0 %v484
    %1315 = vmatpush1.msra.mxu0 %v483
    %1316 = vmatprep.subr.mxu0 %v488
    %1317 = vmatpush1.msra.mxu0 %v487
    %1318 = vmatprep.subr.mxu0 %v492
    %1319 = vmatpush1.msra.mxu0 %v491
    %1320 = vmatprep.subr.mxu0 0.0
    %1321 = vmatpush1.msra.mxu0 0.0
    %1322 = vmatprep.subr.mxu0 0.0
    %1323 = vmatpush1.msra.mxu0 0.0
    %1324 = vmatprep.subr.mxu0 0.0
    %1325 = vmatpush1.msra.mxu0 0.0
    %1326 = vmatprep.subr.mxu0 0.0
    %1327 = vmatpush1.msra.mxu0 0.0
    %1328 = vmatprep.subr.mxu0 0.0
    %1329 = vmatpush1.msra.mxu0 0.0
    %1330 = vmatprep.subr.mxu0 0.0
    %1331 = vmatpush1.msra.mxu0 0.0
    %1332 = vmatprep.subr.mxu0 0.0
    %1333 = vmatpush1.msra.mxu0 0.0
    %1334 = vmatprep.subr.mxu0 0.0
    %1335 = vmatpush1.msra.mxu0 0.0
    %1336 = vmatprep.subr.mxu0 0.0
    %1337 = vmatpush1.msra.mxu0 0.0
    %1338 = vmatprep.subr.mxu0 0.0
    %1339 = vmatpush1.msra.mxu0 0.0
    %1340 = vmatprep.subr.mxu0 0.0
    %1341 = vmatpush1.msra.mxu0 0.0
    %1342 = vmatprep.subr.mxu0 0.0
    %1343 = vmatpush1.msra.mxu0 0.0
    %1344 = vmatprep.subr.mxu0 0.0
    %1345 = vmatpush1.msra.mxu0 0.0
    %1346 = vmatprep.subr.mxu0 0.0
    %1347 = vmatpush1.msra.mxu0 0.0
    %1348 = vmatprep.subr.mxu0 0.0
    %1349 = vmatpush1.msra.mxu0 0.0
    %1350 = vmatprep.subr.mxu0 0.0
    %1351 = vmatpush1.msra.mxu0 0.0
    %1352 = vmatprep.mubr.f32.mxu0 0.0
    %1353 = vmatmul.mubr.f32.gmra.mrb[0].mxu0 %v1207
    %v1354 = vpop.f32.mrb[0].mxu0
    %v1355 = vadd.f32 0.0, %v1354
    %v1356 = vpop.f32.mrb[0].mxu0
    %v1357 = vadd.f32 0.0, %v1356
    %1358 = vdwg.mxu0
    %v1359 = vadd.f32 %v1213, %v1284
    %v1360 = vadd.f32 %v1214, %v1286
    %v1361 = vadd.f32 %v1215, %v1355
    %v1362 = vadd.f32 %v1216, %v1357
    %v1363 = vxor.u32 %v1359, 2147483648
    %v1364 = vmul.f32 %v1363, 1.442695
    %v1365 = vpow.pop %v1364
    %v1366 = vadd.f32 %v1365, 1.0
    %v1367 = vrcp.pop %v1366
    %v1368 = vmul.f32 1.0, %v1367
    %v1369 = vxor.u32 %v1360, 2147483648
    %v1370 = vmul.f32 %v1369, 1.442695
    %v1371 = vpow.pop %v1370
    %v1372 = vadd.f32 %v1371, 1.0
    %v1373 = vrcp.pop %v1372
    %v1374 = vmul.f32 1.0, %v1373
    %v1375 = vtanh.pop %v1361
    %v1376 = vxor.u32 %v1362, 2147483648
    %v1377 = vmul.f32 %v1376, 1.442695
    %v1378 = vpow.pop %v1377
    %v1379 = vadd.f32 %v1378, 1.0
    %v1380 = vrcp.pop %v1379
    %v1381 = vmul.f32 1.0, %v1380
    %v1382 = vmul.f32 %v1374, %v1205
    %v1383 = vmul.f32 %v1368, %v1375
    %v1384 = vadd.f32 %v1382, %v1383
    %v1385 = vtanh.pop %v1384
    %v1386 = vmul.f32 %v1381, %v1385
    %s1387 = scalar_lea.vmem [#allocation13], 32
    %1388 = vst [vmem:[%s1387] sm:$0xff] %v1386
    %s1389 = smul.u32 5, 4
    %s1390 = smul.addr %s1389, 8
    %s1391 = scalar_lea.vmem [#allocation4], %s1390
    %v1392 = vld [vmem:[%s1391] sm:$0xff]
    %v1393 = vld [vmem:[%s1391 + $0x8] sm:$0xff]
    %v1394 = vld [vmem:[%s1391 + $0x10] sm:$0xff]
    %v1395 = vld [vmem:[%s1391 + $0x18] sm:$0xff]
    %1396 = vmatprep.subr.mxu0 %v430
    %1397 = vmatpush1.msra.mxu0 %v429
    %1398 = vmatprep.subr.mxu0 %v434
    %1399 = vmatpush1.msra.mxu0 %v433
    %1400 = vmatprep.subr.mxu0 %v438
    %1401 = vmatpush1.msra.mxu0 %v437
    %1402 = vmatprep.subr.mxu0 %v442
    %1403 = vmatpush1.msra.mxu0 %v441
    %1404 = vmatprep.subr.mxu0 %v446
    %1405 = vmatpush1.msra.mxu0 %v445
    %1406 = vmatprep.subr.mxu0 %v450
    %1407 = vmatpush1.msra.mxu0 %v449
    %1408 = vmatprep.subr.mxu0 %v454
    %1409 = vmatpush1.msra.mxu0 %v453
    %1410 = vmatprep.subr.mxu0 %v458
    %1411 = vmatpush1.msra.mxu0 %v457
    %1412 = vmatprep.subr.mxu0 %v462
    %1413 = vmatpush1.msra.mxu0 %v461
    %1414 = vmatprep.subr.mxu0 %v466
    %1415 = vmatpush1.msra.mxu0 %v465
    %1416 = vmatprep.subr.mxu0 %v470
    %1417 = vmatpush1.msra.mxu0 %v469
    %1418 = vmatprep.subr.mxu0 %v474
    %1419 = vmatpush1.msra.mxu0 %v473
    %1420 = vmatprep.subr.mxu0 %v478
    %1421 = vmatpush1.msra.mxu0 %v477
    %1422 = vmatprep.subr.mxu0 %v482
    %1423 = vmatpush1.msra.mxu0 %v481
    %1424 = vmatprep.subr.mxu0 %v486
    %1425 = vmatpush1.msra.mxu0 %v485
    %1426 = vmatprep.subr.mxu0 %v490
    %1427 = vmatpush1.msra.mxu0 %v489
    %1428 = vmatprep.subr.mxu0 0.0
    %1429 = vmatpush1.msra.mxu0 0.0
    %1430 = vmatprep.subr.mxu0 0.0
    %1431 = vmatpush1.msra.mxu0 0.0
    %1432 = vmatprep.subr.mxu0 0.0
    %1433 = vmatpush1.msra.mxu0 0.0
    %1434 = vmatprep.subr.mxu0 0.0
    %1435 = vmatpush1.msra.mxu0 0.0
    %1436 = vmatprep.subr.mxu0 0.0
    %1437 = vmatpush1.msra.mxu0 0.0
    %1438 = vmatprep.subr.mxu0 0.0
    %1439 = vmatpush1.msra.mxu0 0.0
    %1440 = vmatprep.subr.mxu0 0.0
    %1441 = vmatpush1.msra.mxu0 0.0
    %1442 = vmatprep.subr.mxu0 0.0
    %1443 = vmatpush1.msra.mxu0 0.0
    %1444 = vmatprep.subr.mxu0 0.0
    %1445 = vmatpush1.msra.mxu0 0.0
    %1446 = vmatprep.subr.mxu0 0.0
    %1447 = vmatpush1.msra.mxu0 0.0
    %1448 = vmatprep.subr.mxu0 0.0
    %1449 = vmatpush1.msra.mxu0 0.0
    %1450 = vmatprep.subr.mxu0 0.0
    %1451 = vmatpush1.msra.mxu0 0.0
    %1452 = vmatprep.subr.mxu0 0.0
    %1453 = vmatpush1.msra.mxu0 0.0
    %1454 = vmatprep.subr.mxu0 0.0
    %1455 = vmatpush1.msra.mxu0 0.0
    %1456 = vmatprep.subr.mxu0 0.0
    %1457 = vmatpush1.msra.mxu0 0.0
    %1458 = vmatprep.subr.mxu0 0.0
    %1459 = vmatpush1.msra.mxu0 0.0
    %1460 = vmatprep.mubr.f32.mxu0 0.0
    %1461 = vmatmul.mubr.f32.gmra.mrb[0].mxu0 %v1386
    %v1462 = vpop.f32.mrb[0].mxu0
    %v1463 = vadd.f32 0.0, %v1462
    %v1464 = vpop.f32.mrb[0].mxu0
    %v1465 = vadd.f32 0.0, %v1464
    %1466 = vdwg.mxu0
    %1467 = vmatprep.subr.mxu0 %v432
    %1468 = vmatpush1.msra.mxu0 %v431
    %1469 = vmatprep.subr.mxu0 %v436
    %1470 = vmatpush1.msra.mxu0 %v435
    %1471 = vmatprep.subr.mxu0 %v440
    %1472 = vmatpush1.msra.mxu0 %v439
    %1473 = vmatprep.subr.mxu0 %v444
    %1474 = vmatpush1.msra.mxu0 %v443
    %1475 = vmatprep.subr.mxu0 %v448
    %1476 = vmatpush1.msra.mxu0 %v447
    %1477 = vmatprep.subr.mxu0 %v452
    %1478 = vmatpush1.msra.mxu0 %v451
    %1479 = vmatprep.subr.mxu0 %v456
    %1480 = vmatpush1.msra.mxu0 %v455
    %1481 = vmatprep.subr.mxu0 %v460
    %1482 = vmatpush1.msra.mxu0 %v459
    %1483 = vmatprep.subr.mxu0 %v464
    %1484 = vmatpush1.msra.mxu0 %v463
    %1485 = vmatprep.subr.mxu0 %v468
    %1486 = vmatpush1.msra.mxu0 %v467
    %1487 = vmatprep.subr.mxu0 %v472
    %1488 = vmatpush1.msra.mxu0 %v471
    %1489 = vmatprep.subr.mxu0 %v476
    %1490 = vmatpush1.msra.mxu0 %v475
    %1491 = vmatprep.subr.mxu0 %v480
    %1492 = vmatpush1.msra.mxu0 %v479
    %1493 = vmatprep.subr.mxu0 %v484
    %1494 = vmatpush1.msra.mxu0 %v483
    %1495 = vmatprep.subr.mxu0 %v488
    %1496 = vmatpush1.msra.mxu0 %v487
    %1497 = vmatprep.subr.mxu0 %v492
    %1498 = vmatpush1.msra.mxu0 %v491
    %1499 = vmatprep.subr.mxu0 0.0
    %1500 = vmatpush1.msra.mxu0 0.0
    %1501 = vmatprep.subr.mxu0 0.0
    %1502 = vmatpush1.msra.mxu0 0.0
    %1503 = vmatprep.subr.mxu0 0.0
    %1504 = vmatpush1.msra.mxu0 0.0
    %1505 = vmatprep.subr.mxu0 0.0
    %1506 = vmatpush1.msra.mxu0 0.0
    %1507 = vmatprep.subr.mxu0 0.0
    %1508 = vmatpush1.msra.mxu0 0.0
    %1509 = vmatprep.subr.mxu0 0.0
    %1510 = vmatpush1.msra.mxu0 0.0
    %1511 = vmatprep.subr.mxu0 0.0
    %1512 = vmatpush1.msra.mxu0 0.0
    %1513 = vmatprep.subr.mxu0 0.0
    %1514 = vmatpush1.msra.mxu0 0.0
    %1515 = vmatprep.subr.mxu0 0.0
    %1516 = vmatpush1.msra.mxu0 0.0
    %1517 = vmatprep.subr.mxu0 0.0
    %1518 = vmatpush1.msra.mxu0 0.0
    %1519 = vmatprep.subr.mxu0 0.0
    %1520 = vmatpush1.msra.mxu0 0.0
    %1521 = vmatprep.subr.mxu0 0.0
    %1522 = vmatpush1.msra.mxu0 0.0
    %1523 = vmatprep.subr.mxu0 0.0
    %1524 = vmatpush1.msra.mxu0 0.0
    %1525 = vmatprep.subr.mxu0 0.0
    %1526 = vmatpush1.msra.mxu0 0.0
    %1527 = vmatprep.subr.mxu0 0.0
    %1528 = vmatpush1.msra.mxu0 0.0
    %1529 = vmatprep.subr.mxu0 0.0
    %1530 = vmatpush1.msra.mxu0 0.0
    %1531 = vmatprep.mubr.f32.mxu0 0.0
    %1532 = vmatmul.mubr.f32.gmra.mrb[0].mxu0 %v1386
    %v1533 = vpop.f32.mrb[0].mxu0
    %v1534 = vadd.f32 0.0, %v1533
    %v1535 = vpop.f32.mrb[0].mxu0
    %v1536 = vadd.f32 0.0, %v1535
    %1537 = vdwg.mxu0
    %v1538 = vadd.f32 %v1392, %v1463
    %v1539 = vadd.f32 %v1393, %v1465
    %v1540 = vadd.f32 %v1394, %v1534
    %v1541 = vadd.f32 %v1395, %v1536
    %v1542 = vxor.u32 %v1538, 2147483648
    %v1543 = vmul.f32 %v1542, 1.442695
    %v1544 = vpow.pop %v1543
    %v1545 = vadd.f32 %v1544, 1.0
    %v1546 = vrcp.pop %v1545
    %v1547 = vmul.f32 1.0, %v1546
    %v1548 = vxor.u32 %v1539, 2147483648
    %v1549 = vmul.f32 %v1548, 1.442695
    %v1550 = vpow.pop %v1549
    %v1551 = vadd.f32 %v1550, 1.0
    %v1552 = vrcp.pop %v1551
    %v1553 = vmul.f32 1.0, %v1552
    %v1554 = vtanh.pop %v1540
    %v1555 = vxor.u32 %v1541, 2147483648
    %v1556 = vmul.f32 %v1555, 1.442695
    %v1557 = vpow.pop %v1556
    %v1558 = vadd.f32 %v1557, 1.0
    %v1559 = vrcp.pop %v1558
    %v1560 = vmul.f32 1.0, %v1559
    %v1561 = vmul.f32 %v1553, %v1384
    %v1562 = vmul.f32 %v1547, %v1554
    %v1563 = vadd.f32 %v1561, %v1562
    %v1564 = vtanh.pop %v1563
    %v1565 = vmul.f32 %v1560, %v1564
    %s1566 = scalar_lea.vmem [#allocation13], 40
    %1567 = vst [vmem:[%s1566] sm:$0xff] %v1565
    %s1568 = smul.u32 6, 4
    %s1569 = smul.addr %s1568, 8
    %s1570 = scalar_lea.vmem [#allocation4], %s1569
    %v1571 = vld [vmem:[%s1570] sm:$0xff]
    %v1572 = vld [vmem:[%s1570 + $0x8] sm:$0xff]
    %v1573 = vld [vmem:[%s1570 + $0x10] sm:$0xff]
    %v1574 = vld [vmem:[%s1570 + $0x18] sm:$0xff]
    %1575 = vmatprep.subr.mxu0 %v430
    %1576 = vmatpush1.msra.mxu0 %v429
    %1577 = vmatprep.subr.mxu0 %v434
    %1578 = vmatpush1.msra.mxu0 %v433
    %1579 = vmatprep.subr.mxu0 %v438
    %1580 = vmatpush1.msra.mxu0 %v437
    %1581 = vmatprep.subr.mxu0 %v442
    %1582 = vmatpush1.msra.mxu0 %v441
    %1583 = vmatprep.subr.mxu0 %v446
    %1584 = vmatpush1.msra.mxu0 %v445
    %1585 = vmatprep.subr.mxu0 %v450
    %1586 = vmatpush1.msra.mxu0 %v449
    %1587 = vmatprep.subr.mxu0 %v454
    %1588 = vmatpush1.msra.mxu0 %v453
    %1589 = vmatprep.subr.mxu0 %v458
    %1590 = vmatpush1.msra.mxu0 %v457
    %1591 = vmatprep.subr.mxu0 %v462
    %1592 = vmatpush1.msra.mxu0 %v461
    %1593 = vmatprep.subr.mxu0 %v466
    %1594 = vmatpush1.msra.mxu0 %v465
    %1595 = vmatprep.subr.mxu0 %v470
    %1596 = vmatpush1.msra.mxu0 %v469
    %1597 = vmatprep.subr.mxu0 %v474
    %1598 = vmatpush1.msra.mxu0 %v473
    %1599 = vmatprep.subr.mxu0 %v478
    %1600 = vmatpush1.msra.mxu0 %v477
    %1601 = vmatprep.subr.mxu0 %v482
    %1602 = vmatpush1.msra.mxu0 %v481
    %1603 = vmatprep.subr.mxu0 %v486
    %1604 = vmatpush1.msra.mxu0 %v485
    %1605 = vmatprep.subr.mxu0 %v490
    %1606 = vmatpush1.msra.mxu0 %v489
    %1607 = vmatprep.subr.mxu0 0.0
    %1608 = vmatpush1.msra.mxu0 0.0
    %1609 = vmatprep.subr.mxu0 0.0
    %1610 = vmatpush1.msra.mxu0 0.0
    %1611 = vmatprep.subr.mxu0 0.0
    %1612 = vmatpush1.msra.mxu0 0.0
    %1613 = vmatprep.subr.mxu0 0.0
    %1614 = vmatpush1.msra.mxu0 0.0
    %1615 = vmatprep.subr.mxu0 0.0
    %1616 = vmatpush1.msra.mxu0 0.0
    %1617 = vmatprep.subr.mxu0 0.0
    %1618 = vmatpush1.msra.mxu0 0.0
    %1619 = vmatprep.subr.mxu0 0.0
    %1620 = vmatpush1.msra.mxu0 0.0
    %1621 = vmatprep.subr.mxu0 0.0
    %1622 = vmatpush1.msra.mxu0 0.0
    %1623 = vmatprep.subr.mxu0 0.0
    %1624 = vmatpush1.msra.mxu0 0.0
    %1625 = vmatprep.subr.mxu0 0.0
    %1626 = vmatpush1.msra.mxu0 0.0
    %1627 = vmatprep.subr.mxu0 0.0
    %1628 = vmatpush1.msra.mxu0 0.0
    %1629 = vmatprep.subr.mxu0 0.0
    %1630 = vmatpush1.msra.mxu0 0.0
    %1631 = vmatprep.subr.mxu0 0.0
    %1632 = vmatpush1.msra.mxu0 0.0
    %1633 = vmatprep.subr.mxu0 0.0
    %1634 = vmatpush1.msra.mxu0 0.0
    %1635 = vmatprep.subr.mxu0 0.0
    %1636 = vmatpush1.msra.mxu0 0.0
    %1637 = vmatprep.subr.mxu0 0.0
    %1638 = vmatpush1.msra.mxu0 0.0
    %1639 = vmatprep.mubr.f32.mxu0 0.0
    %1640 = vmatmul.mubr.f32.gmra.mrb[0].mxu0 %v1565
    %v1641 = vpop.f32.mrb[0].mxu0
    %v1642 = vadd.f32 0.0, %v1641
    %v1643 = vpop.f32.mrb[0].mxu0
    %v1644 = vadd.f32 0.0, %v1643
    %1645 = vdwg.mxu0
    %1646 = vmatprep.subr.mxu0 %v432
    %1647 = vmatpush1.msra.mxu0 %v431
    %1648 = vmatprep.subr.mxu0 %v436
    %1649 = vmatpush1.msra.mxu0 %v435
    %1650 = vmatprep.subr.mxu0 %v440
    %1651 = vmatpush1.msra.mxu0 %v439
    %1652 = vmatprep.subr.mxu0 %v444
    %1653 = vmatpush1.msra.mxu0 %v443
    %1654 = vmatprep.subr.mxu0 %v448
    %1655 = vmatpush1.msra.mxu0 %v447
    %1656 = vmatprep.subr.mxu0 %v452
    %1657 = vmatpush1.msra.mxu0 %v451
    %1658 = vmatprep.subr.mxu0 %v456
    %1659 = vmatpush1.msra.mxu0 %v455
    %1660 = vmatprep.subr.mxu0 %v460
    %1661 = vmatpush1.msra.mxu0 %v459
    %1662 = vmatprep.subr.mxu0 %v464
    %1663 = vmatpush1.msra.mxu0 %v463
    %1664 = vmatprep.subr.mxu0 %v468
    %1665 = vmatpush1.msra.mxu0 %v467
    %1666 = vmatprep.subr.mxu0 %v472
    %1667 = vmatpush1.msra.mxu0 %v471
    %1668 = vmatprep.subr.mxu0 %v476
    %1669 = vmatpush1.msra.mxu0 %v475
    %1670 = vmatprep.subr.mxu0 %v480
    %1671 = vmatpush1.msra.mxu0 %v479
    %1672 = vmatprep.subr.mxu0 %v484
    %1673 = vmatpush1.msra.mxu0 %v483
    %1674 = vmatprep.subr.mxu0 %v488
    %1675 = vmatpush1.msra.mxu0 %v487
    %1676 = vmatprep.subr.mxu0 %v492
    %1677 = vmatpush1.msra.mxu0 %v491
    %1678 = vmatprep.subr.mxu0 0.0
    %1679 = vmatpush1.msra.mxu0 0.0
    %1680 = vmatprep.subr.mxu0 0.0
    %1681 = vmatpush1.msra.mxu0 0.0
    %1682 = vmatprep.subr.mxu0 0.0
    %1683 = vmatpush1.msra.mxu0 0.0
    %1684 = vmatprep.subr.mxu0 0.0
    %1685 = vmatpush1.msra.mxu0 0.0
    %1686 = vmatprep.subr.mxu0 0.0
    %1687 = vmatpush1.msra.mxu0 0.0
    %1688 = vmatprep.subr.mxu0 0.0
    %1689 = vmatpush1.msra.mxu0 0.0
    %1690 = vmatprep.subr.mxu0 0.0
    %1691 = vmatpush1.msra.mxu0 0.0
    %1692 = vmatprep.subr.mxu0 0.0
    %1693 = vmatpush1.msra.mxu0 0.0
    %1694 = vmatprep.subr.mxu0 0.0
    %1695 = vmatpush1.msra.mxu0 0.0
    %1696 = vmatprep.subr.mxu0 0.0
    %1697 = vmatpush1.msra.mxu0 0.0
    %1698 = vmatprep.subr.mxu0 0.0
    %1699 = vmatpush1.msra.mxu0 0.0
    %1700 = vmatprep.subr.mxu0 0.0
    %1701 = vmatpush1.msra.mxu0 0.0
    %1702 = vmatprep.subr.mxu0 0.0
    %1703 = vmatpush1.msra.mxu0 0.0
    %1704 = vmatprep.subr.mxu0 0.0
    %1705 = vmatpush1.msra.mxu0 0.0
    %1706 = vmatprep.subr.mxu0 0.0
    %1707 = vmatpush1.msra.mxu0 0.0
    %1708 = vmatprep.subr.mxu0 0.0
    %1709 = vmatpush1.msra.mxu0 0.0
    %1710 = vmatprep.mubr.f32.mxu0 0.0
    %1711 = vmatmul.mubr.f32.gmra.mrb[0].mxu0 %v1565
    %v1712 = vpop.f32.mrb[0].mxu0
    %v1713 = vadd.f32 0.0, %v1712
    %v1714 = vpop.f32.mrb[0].mxu0
    %v1715 = vadd.f32 0.0, %v1714
    %1716 = vdwg.mxu0
    %v1717 = vadd.f32 %v1571, %v1642
    %v1718 = vadd.f32 %v1572, %v1644
    %v1719 = vadd.f32 %v1573, %v1713
    %v1720 = vadd.f32 %v1574, %v1715
    %v1721 = vxor.u32 %v1717, 2147483648
    %v1722 = vmul.f32 %v1721, 1.442695
    %v1723 = vpow.pop %v1722
    %v1724 = vadd.f32 %v1723, 1.0
    %v1725 = vrcp.pop %v1724
    %v1726 = vmul.f32 1.0, %v1725
    %v1727 = vxor.u32 %v1718, 2147483648
    %v1728 = vmul.f32 %v1727, 1.442695
    %v1729 = vpow.pop %v1728
    %v1730 = vadd.f32 %v1729, 1.0
    %v1731 = vrcp.pop %v1730
    %v1732 = vmul.f32 1.0, %v1731
    %v1733 = vtanh.pop %v1719
    %v1734 = vxor.u32 %v1720, 2147483648
    %v1735 = vmul.f32 %v1734, 1.442695
    %v1736 = vpow.pop %v1735
    %v1737 = vadd.f32 %v1736, 1.0
    %v1738 = vrcp.pop %v1737
    %v1739 = vmul.f32 1.0, %v1738
    %v1740 = vmul.f32 %v1732, %v1563
    %v1741 = vmul.f32 %v1726, %v1733
    %v1742 = vadd.f32 %v1740, %v1741
    %v1743 = vtanh.pop %v1742
    %v1744 = vmul.f32 %v1739, %v1743
    %s1745 = scalar_lea.vmem [#allocation13], 48
    %1746 = vst [vmem:[%s1745] sm:$0xff] %v1744
    %s1747 = smul.u32 7, 4
    %s1748 = smul.addr %s1747, 8
    %s1749 = scalar_lea.vmem [#allocation4], %s1748
    %v1750 = vld [vmem:[%s1749] sm:$0xff]
    %v1751 = vld [vmem:[%s1749 + $0x8] sm:$0xff]
    %v1752 = vld [vmem:[%s1749 + $0x10] sm:$0xff]
    %v1753 = vld [vmem:[%s1749 + $0x18] sm:$0xff]
    %1754 = vmatprep.subr.mxu0 %v430
    %1755 = vmatpush1.msra.mxu0 %v429
    %1756 = vmatprep.subr.mxu0 %v434
    %1757 = vmatpush1.msra.mxu0 %v433
    %1758 = vmatprep.subr.mxu0 %v438
    %1759 = vmatpush1.msra.mxu0 %v437
    %1760 = vmatprep.subr.mxu0 %v442
    %1761 = vmatpush1.msra.mxu0 %v441
    %1762 = vmatprep.subr.mxu0 %v446
    %1763 = vmatpush1.msra.mxu0 %v445
    %1764 = vmatprep.subr.mxu0 %v450
    %1765 = vmatpush1.msra.mxu0 %v449
    %1766 = vmatprep.subr.mxu0 %v454
    %1767 = vmatpush1.msra.mxu0 %v453
    %1768 = vmatprep.subr.mxu0 %v458
    %1769 = vmatpush1.msra.mxu0 %v457
    %1770 = vmatprep.subr.mxu0 %v462
    %1771 = vmatpush1.msra.mxu0 %v461
    %1772 = vmatprep.subr.mxu0 %v466
    %1773 = vmatpush1.msra.mxu0 %v465
    %1774 = vmatprep.subr.mxu0 %v470
    %1775 = vmatpush1.msra.mxu0 %v469
    %1776 = vmatprep.subr.mxu0 %v474
    %1777 = vmatpush1.msra.mxu0 %v473
    %1778 = vmatprep.subr.mxu0 %v478
    %1779 = vmatpush1.msra.mxu0 %v477
    %1780 = vmatprep.subr.mxu0 %v482
    %1781 = vmatpush1.msra.mxu0 %v481
    %1782 = vmatprep.subr.mxu0 %v486
    %1783 = vmatpush1.msra.mxu0 %v485
    %1784 = vmatprep.subr.mxu0 %v490
    %1785 = vmatpush1.msra.mxu0 %v489
    %1786 = vmatprep.subr.mxu0 0.0
    %1787 = vmatpush1.msra.mxu0 0.0
    %1788 = vmatprep.subr.mxu0 0.0
    %1789 = vmatpush1.msra.mxu0 0.0
    %1790 = vmatprep.subr.mxu0 0.0
    %1791 = vmatpush1.msra.mxu0 0.0
    %1792 = vmatprep.subr.mxu0 0.0
    %1793 = vmatpush1.msra.mxu0 0.0
    %1794 = vmatprep.subr.mxu0 0.0
    %1795 = vmatpush1.msra.mxu0 0.0
    %1796 = vmatprep.subr.mxu0 0.0
    %1797 = vmatpush1.msra.mxu0 0.0
    %1798 = vmatprep.subr.mxu0 0.0
    %1799 = vmatpush1.msra.mxu0 0.0
    %1800 = vmatprep.subr.mxu0 0.0
    %1801 = vmatpush1.msra.mxu0 0.0
    %1802 = vmatprep.subr.mxu0 0.0
    %1803 = vmatpush1.msra.mxu0 0.0
    %1804 = vmatprep.subr.mxu0 0.0
    %1805 = vmatpush1.msra.mxu0 0.0
    %1806 = vmatprep.subr.mxu0 0.0
    %1807 = vmatpush1.msra.mxu0 0.0
    %1808 = vmatprep.subr.mxu0 0.0
    %1809 = vmatpush1.msra.mxu0 0.0
    %1810 = vmatprep.subr.mxu0 0.0
    %1811 = vmatpush1.msra.mxu0 0.0
    %1812 = vmatprep.subr.mxu0 0.0
    %1813 = vmatpush1.msra.mxu0 0.0
    %1814 = vmatprep.subr.mxu0 0.0
    %1815 = vmatpush1.msra.mxu0 0.0
    %1816 = vmatprep.subr.mxu0 0.0
    %1817 = vmatpush1.msra.mxu0 0.0
    %1818 = vmatprep.mubr.f32.mxu0 0.0
    %1819 = vmatmul.mubr.f32.gmra.mrb[0].mxu0 %v1744
    %v1820 = vpop.f32.mrb[0].mxu0
    %v1821 = vadd.f32 0.0, %v1820
    %v1822 = vpop.f32.mrb[0].mxu0
    %v1823 = vadd.f32 0.0, %v1822
    %1824 = vdwg.mxu0
    %1825 = vmatprep.subr.mxu0 %v432
    %1826 = vmatpush1.msra.mxu0 %v431
    %1827 = vmatprep.subr.mxu0 %v436
    %1828 = vmatpush1.msra.mxu0 %v435
    %1829 = vmatprep.subr.mxu0 %v440
    %1830 = vmatpush1.msra.mxu0 %v439
    %1831 = vmatprep.subr.mxu0 %v444
    %1832 = vmatpush1.msra.mxu0 %v443
    %1833 = vmatprep.subr.mxu0 %v448
    %1834 = vmatpush1.msra.mxu0 %v447
    %1835 = vmatprep.subr.mxu0 %v452
    %1836 = vmatpush1.msra.mxu0 %v451
    %1837 = vmatprep.subr.mxu0 %v456
    %1838 = vmatpush1.msra.mxu0 %v455
    %1839 = vmatprep.subr.mxu0 %v460
    %1840 = vmatpush1.msra.mxu0 %v459
    %1841 = vmatprep.subr.mxu0 %v464
    %1842 = vmatpush1.msra.mxu0 %v463
    %1843 = vmatprep.subr.mxu0 %v468
    %1844 = vmatpush1.msra.mxu0 %v467
    %1845 = vmatprep.subr.mxu0 %v472
    %1846 = vmatpush1.msra.mxu0 %v471
    %1847 = vmatprep.subr.mxu0 %v476
    %1848 = vmatpush1.msra.mxu0 %v475
    %1849 = vmatprep.subr.mxu0 %v480
    %1850 = vmatpush1.msra.mxu0 %v479
    %1851 = vmatprep.subr.mxu0 %v484
    %1852 = vmatpush1.msra.mxu0 %v483
    %1853 = vmatprep.subr.mxu0 %v488
    %1854 = vmatpush1.msra.mxu0 %v487
    %1855 = vmatprep.subr.mxu0 %v492
    %1856 = vmatpush1.msra.mxu0 %v491
    %1857 = vmatprep.subr.mxu0 0.0
    %1858 = vmatpush1.msra.mxu0 0.0
    %1859 = vmatprep.subr.mxu0 0.0
    %1860 = vmatpush1.msra.mxu0 0.0
    %1861 = vmatprep.subr.mxu0 0.0
    %1862 = vmatpush1.msra.mxu0 0.0
    %1863 = vmatprep.subr.mxu0 0.0
    %1864 = vmatpush1.msra.mxu0 0.0
    %1865 = vmatprep.subr.mxu0 0.0
    %1866 = vmatpush1.msra.mxu0 0.0
    %1867 = vmatprep.subr.mxu0 0.0
    %1868 = vmatpush1.msra.mxu0 0.0
    %1869 = vmatprep.subr.mxu0 0.0
    %1870 = vmatpush1.msra.mxu0 0.0
    %1871 = vmatprep.subr.mxu0 0.0
    %1872 = vmatpush1.msra.mxu0 0.0
    %1873 = vmatprep.subr.mxu0 0.0
    %1874 = vmatpush1.msra.mxu0 0.0
    %1875 = vmatprep.subr.mxu0 0.0
    %1876 = vmatpush1.msra.mxu0 0.0
    %1877 = vmatprep.subr.mxu0 0.0
    %1878 = vmatpush1.msra.mxu0 0.0
    %1879 = vmatprep.subr.mxu0 0.0
    %1880 = vmatpush1.msra.mxu0 0.0
    %1881 = vmatprep.subr.mxu0 0.0
    %1882 = vmatpush1.msra.mxu0 0.0
    %1883 = vmatprep.subr.mxu0 0.0
    %1884 = vmatpush1.msra.mxu0 0.0
    %1885 = vmatprep.subr.mxu0 0.0
    %1886 = vmatpush1.msra.mxu0 0.0
    %1887 = vmatprep.subr.mxu0 0.0
    %1888 = vmatpush1.msra.mxu0 0.0
    %1889 = vmatprep.mubr.f32.mxu0 0.0
    %1890 = vmatmul.mubr.f32.gmra.mrb[0].mxu0 %v1744
    %v1891 = vpop.f32.mrb[0].mxu0
    %v1892 = vadd.f32 0.0, %v1891
    %v1893 = vpop.f32.mrb[0].mxu0
    %v1894 = vadd.f32 0.0, %v1893
    %1895 = vdwg.mxu0
    %v1896 = vadd.f32 %v1750, %v1821
    %v1897 = vadd.f32 %v1751, %v1823
    %v1898 = vadd.f32 %v1752, %v1892
    %v1899 = vadd.f32 %v1753, %v1894
    %v1900 = vxor.u32 %v1896, 2147483648
    %v1901 = vmul.f32 %v1900, 1.442695
    %v1902 = vpow.pop %v1901
    %v1903 = vadd.f32 %v1902, 1.0
    %v1904 = vrcp.pop %v1903
    %v1905 = vmul.f32 1.0, %v1904
    %v1906 = vxor.u32 %v1897, 2147483648
    %v1907 = vmul.f32 %v1906, 1.442695
    %v1908 = vpow.pop %v1907
    %v1909 = vadd.f32 %v1908, 1.0
    %v1910 = vrcp.pop %v1909
    %v1911 = vmul.f32 1.0, %v1910
    %v1912 = vtanh.pop %v1898
    %v1913 = vxor.u32 %v1899, 2147483648
    %v1914 = vmul.f32 %v1913, 1.442695
    %v1915 = vpow.pop %v1914
    %v1916 = vadd.f32 %v1915, 1.0
    %v1917 = vrcp.pop %v1916
    %v1918 = vmul.f32 1.0, %v1917
    %v1919 = vmul.f32 %v1911, %v1742
    %v1920 = vmul.f32 %v1905, %v1912
    %v1921 = vadd.f32 %v1919, %v1920
    %v1922 = vtanh.pop %v1921
    %v1923 = vmul.f32 %v1918, %v1922
    %s1924 = scalar_lea.vmem [#allocation13], 56
    %1925 = vst [vmem:[%s1924] sm:$0xff] %v1923
    %1926 = vst [vmem:[#allocation2] sm:$0xff] %v1923
    %1927 = vst [vmem:[#allocation3] sm:$0xff] %v1921
    // Predicated region
    $region38: #{tpu_custom_call.1} parent=1 // pred_check
      _
    $region39: #{tpu_custom_call.1} parent=1 // pred_check_branch
      %1929 = sbr.rel (0) target = $region41
    $region40: #{tpu_custom_call.1} parent=1 // pred_region
      %s1931 = ssub.s32 1024, 1024
      %1932 = vsyncadd [#allocation7], %s1931
      %s1933 = sshll.u32 [#allocation13], 4
      %s1934 = int_to_ptr.vmem [resolvable:$true] %s1933
      %1939 = dma.vmem_to_hbm [thread:$0]  %s1934, 1024, %s4, [#allocation7], 128, 128, 8
    $region41: #{tpu_custom_call.1} parent=1 // pred_fallthru
      _
    // Predicated region
    $region42: #{tpu_custom_call.1} parent=1 // pred_check
      _
    $region43: #{tpu_custom_call.1} parent=1 // pred_check_branch
      %1941 = sbr.rel (0) target = $region45
    $region44: #{tpu_custom_call.1} parent=1 // pred_region
      %1942 = dma.done [#allocation7], 1024
    $region45: #{tpu_custom_call.1} parent=1 // pred_fallthru
      _
    %1943 = vsyncpa [#allocation6], 1
    %1944 = vsyncpa [#allocation9], 1
    %1945 = vsyncpa [#allocation12], 1
    %1946 = vsyncpa [#allocation7], 1

</llo_original>
